<compile_context>
chip_gen: v5e
topology: v5e:2x2
jax: 0.10.0
libtpu: 0.0.40
codegen_flags: <defaults>
</compile_context>

<pallas_src>
import functools

import jax
import jax.numpy as jnp
from jax import lax
from jax.experimental import pallas as pl
from jax.experimental.pallas import tpu as pltpu


# ----------------------------------------------------------------------------
# helper: static lane shift (out[:, p] = arr[:, p + off], zero filled at ends).
# ----------------------------------------------------------------------------
def _lane_shift(arr, off):
    if off == 0:
        return arr
    c_, _ = arr.shape
    if off > 0:
        return jnp.concatenate([arr[:, off:], jnp.zeros((c_, off), arr.dtype)], axis=1)
    return jnp.concatenate([jnp.zeros((c_, -off), arr.dtype), arr[:, :off]], axis=1)


# ----------------------------------------------------------------------------
# Kernel 1 (fused): qkv 1x1 conv (MXU) + 3x3 depthwise conv (shifted VPU MACs).
# ----------------------------------------------------------------------------
def _qkv_dw_pallas(x, w_qkv, w_dw):
    """x: (b, c, h, w) f32 -> depthwise(conv1x1(x)) : (b, 5c, h, w) f32 (both bias-free)."""
    b, c, h, w = x.shape
    c5 = w_qkv.shape[0]
    hp, wp = h + 2, w + 2
    sp = hp * wp
    sp_pad = ((sp + 127) // 128) * 128            # lane-dense (multiple of 128)

    wq2 = w_qkv.reshape(c5, c)                    # (5c, c) 1x1 conv weights
    wd9 = w_dw.reshape(c5, 9)                     # per-channel 3x3 taps, tap-major columns

    # One zero pad of x: serves both as the conv input and as the dw 'same' halo
    # (valid only because the 1x1 conv has no bias -> halo of qkv stays exactly zero).
    xp = jnp.pad(x, ((0, 0), (0, 0), (1, 1), (1, 1))).reshape(b, c, sp)
    xp = jnp.pad(xp, ((0, 0), (0, 0), (0, sp_pad - sp)))

    def kernel(x_ref, wq_ref, wd_ref, o_ref, qkv_scr):
        # x: (1, c, sp_pad) f32; wq: (c5, c) f32; wd: (c5, 9) f32
        # o: (1, c5, sp_pad) f32 (padded-flat dw result); qkv_scr: VMEM (c5, sp_pad) f32
        xb = x_ref[0].astype(jnp.bfloat16)
        wb = wq_ref[...].astype(jnp.bfloat16)
        qkv_scr[...] = jnp.dot(wb, xb, preferred_element_type=jnp.float32)
        qkv = qkv_scr[...]                         # stays in VMEM, no HBM round-trip
        wd = wd_ref[...]
        acc = jnp.zeros_like(qkv)
        for j in range(9):                         # 9 depthwise taps, unrolled
            dy, dx = divmod(j, 3)
            off = (dy - 1) * wp + (dx - 1)         # flat-padded neighbour offset
            acc = acc + _lane_shift(qkv, off) * wd[:, j:j + 1]
        o_ref[0] = acc                             # interior is correct; halo is discarded

    out_pad = pl.pallas_call(
        kernel,
        out_shape=jax.ShapeDtypeStruct((b, c5, sp_pad), jnp.float32),
        grid=(b,),
        in_specs=[
            pl.BlockSpec((1, c, sp_pad), lambda n: (n, 0, 0)),
            pl.BlockSpec((c5, c), lambda n: (0, 0)),
            pl.BlockSpec((c5, 9), lambda n: (0, 0)),
        ],
        out_specs=pl.BlockSpec((1, c5, sp_pad), lambda n: (n, 0, 0)),
        scratch_shapes=[pltpu.VMEM((c5, sp_pad), jnp.float32)],
        compiler_params=pltpu.CompilerParams(dimension_semantics=("parallel",)),
    )(xp, wq2, wd9)

    # Crop the 1-pixel halo (cheap fused XLA slice) -> NCHW interior.
    return out_pad[:, :, :sp].reshape(b, c5, hp, wp)[:, :, 1:1 + h, 1:1 + w]


# ----------------------------------------------------------------------------
# Kernel 2: fused attention branch, heads folded into the MXU M dimension.
# ----------------------------------------------------------------------------
def _attn_kernel(temp_ref, mask_ref, q_ref, k_ref, v_ref, o_ref):
    # temp: (M, 1) per-row temperature; mask: (M, M) block-diagonal 0/1;
    # q/k/v/o: (1, M, S) with M = num_heads * T, S multiple of 128.
    q = q_ref[0]
    k = k_ref[0]
    v = v_ref[0]
    # torch F.normalize: x / max(||x||, 1e-12)  ==  x * rsqrt(max(||x||^2, 1e-24))
    q_inv = lax.rsqrt(jnp.maximum(jnp.sum(q * q, axis=-1, keepdims=True), 1e-24))
    k_inv = lax.rsqrt(jnp.maximum(jnp.sum(k * k, axis=-1, keepdims=True), 1e-24))
    qn = (q * q_inv).astype(jnp.bfloat16)
    kn = (k * k_inv).astype(jnp.bfloat16)
    # One big matmul over all heads; off-diagonal head blocks are masked away below.
    scores = lax.dot_general(qn, kn, (((1,), (1,)), ((), ())),
                             preferred_element_type=jnp.float32)      # (M, M)
    scores = scores * temp_ref[...]                                    # per-head temperature
    # Normalised rows => |scores| <= |temperature|, so exp needs no max-subtraction.
    e = jnp.exp(scores) * mask_ref[...]                                # block-diagonal softmax_1
    denom = jnp.sum(e, axis=-1, keepdims=True) + 1.0                   # "+1" denominator
    p = (e * pl.reciprocal(denom, approx=True)).astype(jnp.bfloat16)
    o_ref[0] = jnp.dot(p, v.astype(jnp.bfloat16), preferred_element_type=jnp.float32)


def _attn_pallas(q, k, v, temperature):
    """q/k/v: (BB, NH, T, S) f32 (S padded with zeros to a 128 multiple) -> (BB, NH, T, S)."""
    bb, nh, t, s = q.shape
    m = nh * t
    qf = q.reshape(bb, m, s)
    kf = k.reshape(bb, m, s)
    vf = v.reshape(bb, m, s)
    hid = jnp.arange(m, dtype=jnp.int32) // t
    mask = (hid[:, None] == hid[None, :]).astype(jnp.float32)          # (M, M) block diag
    temp_rows = jnp.repeat(temperature.reshape(nh), t).reshape(m, 1).astype(jnp.float32)

    out = pl.pallas_call(
        _attn_kernel,
        out_shape=jax.ShapeDtypeStruct((bb, m, s), jnp.float32),
        grid=(bb,),
        in_specs=[
            pl.BlockSpec((m, 1), lambda n: (0, 0)),
            pl.BlockSpec((m, m), lambda n: (0, 0)),
            pl.BlockSpec((1, m, s), lambda n: (n, 0, 0)),
            pl.BlockSpec((1, m, s), lambda n: (n, 0, 0)),
            pl.BlockSpec((1, m, s), lambda n: (n, 0, 0)),
        ],
        out_specs=pl.BlockSpec((1, m, s), lambda n: (n, 0, 0)),
        compiler_params=pltpu.CompilerParams(dimension_semantics=("parallel",)),
    )(temp_rows, mask, qf, kf, vf)
    return out.reshape(bb, nh, t, s)


# ----------------------------------------------------------------------------
# Kernel 3: fused out1*out2 product + 1x1 projection matmul (lane-dense store).
# ----------------------------------------------------------------------------
def _proj_kernel(a_ref, b_ref, w_ref, o_ref):
    # a/b: (1, C, HW) f32, w: (C, C) f32, o: (1, C, HW) f32
    prod = (a_ref[0] * b_ref[0]).astype(jnp.bfloat16)
    o_ref[0] = jnp.dot(w_ref[...].astype(jnp.bfloat16), prod,
                       preferred_element_type=jnp.float32)


def _proj_pallas(a, b_, w_proj2):
    n, c, s = a.shape
    return pl.pallas_call(
        _proj_kernel,
        out_shape=jax.ShapeDtypeStruct((n, c, s), jnp.float32),
        grid=(n,),
        in_specs=[
            pl.BlockSpec((1, c, s), lambda i: (i, 0, 0)),
            pl.BlockSpec((1, c, s), lambda i: (i, 0, 0)),
            pl.BlockSpec((c, c), lambda i: (0, 0)),
        ],
        out_specs=pl.BlockSpec((1, c, s), lambda i: (i, 0, 0)),
        compiler_params=pltpu.CompilerParams(dimension_semantics=("parallel",)),
    )(a, b_, w_proj2)


# ----------------------------------------------------------------------------
# Pure-JAX references for the compute blocks (numerical validation only).
# ----------------------------------------------------------------------------
def _qkv_dw_ref(x, w_qkv, w_dw):
    qkv = lax.conv_general_dilated(
        x, w_qkv, (1, 1), "VALID", dimension_numbers=("NCHW", "OIHW", "NCHW"))
    return lax.conv_general_dilated(
        qkv, w_dw, (1, 1), ((1, 1), (1, 1)),
        dimension_numbers=("NCHW", "OIHW", "NCHW"), feature_group_count=qkv.shape[1])


def _attn_ref(q, k, v, temperature):
    qn = q / jnp.maximum(jnp.sqrt(jnp.sum(q * q, axis=-1, keepdims=True)), 1e-12)
    kn = k / jnp.maximum(jnp.sqrt(jnp.sum(k * k, axis=-1, keepdims=True)), 1e-12)
    attn = jnp.einsum("bhtd,bhsd->bhts", qn, kn) * temperature[None]
    e = jnp.exp(attn)
    p = e / (jnp.sum(e, axis=-1, keepdims=True) + 1.0)
    return jnp.einsum("bhts,bhsd->bhtd", p, v)


def _proj_ref(a, b_, w_proj2):
    return jnp.einsum("oc,bcs->bos", w_proj2, a * b_)


# ----------------------------------------------------------------------------
# Full DHSA forward (NCHW in / NCHW out), matching the PyTorch module.
# ----------------------------------------------------------------------------
def dhsa_forward(x, params, num_heads=4, use_pallas=True):
    w_qkv, w_dw, w_proj, temperature = params
    b, c, h, w = x.shape
    ch = c // 2
    hw = h * w
    factor = num_heads

    # -- sort the first half of the channels along H, then along W (data dependent; JAX) --
    x_half = x[:, :ch]
    idx_h = jnp.argsort(x_half, axis=-2)
    xs = jnp.take_along_axis(x_half, idx_h, axis=-2)
    idx_w = jnp.argsort(xs, axis=-1)
    xs = jnp.take_along_axis(xs, idx_w, axis=-1)
    x_mod = jnp.concatenate([xs, x[:, ch:]], axis=1)

    # -- fused qkv 1x1 conv + 3x3 depthwise conv --
    if use_pallas:
        qkv = _qkv_dw_pallas(x_mod, w_qkv, w_dw)
    else:
        qkv = _qkv_dw_ref(x_mod, w_qkv, w_dw)
    qkv = qkv.reshape(b, 5 * c, hw)
    q1, k1, q2, k2, v = [qkv[:, i * c:(i + 1) * c] for i in range(5)]

    # -- sort v along flattened spatial axis, gather q/k with the same permutation (JAX) --
    idx = jnp.argsort(v, axis=-1)
    v_s = jnp.take_along_axis(v, idx, axis=-1)
    q1_s = jnp.take_along_axis(q1, idx, axis=-1)
    k1_s = jnp.take_along_axis(k1, idx, axis=-1)
    q2_s = jnp.take_along_axis(q2, idx, axis=-1)
    k2_s = jnp.take_along_axis(k2, idx, axis=-1)

    # -- head / token rearrangement; per-head spatial padded to a lane-dense 128 multiple --
    pad_n = (-hw) % factor
    hw_p = hw + pad_n
    s_len = hw_p // factor
    s_pad = ((s_len + 127) // 128) * 128
    cp = c // num_heads

    def _pad_hw(t):
        return jnp.pad(t, ((0, 0), (0, 0), (0, pad_n))) if pad_n else t

    def to_heads(t, box):
        t = _pad_hw(t)
        if box:    # 'b (head c) (factor hw) -> b head (c factor) hw'
            t = t.reshape(b, num_heads, cp, factor, s_len)
        else:      # 'b (head c) (hw factor) -> b head (c factor) hw'
            t = t.reshape(b, num_heads, cp, s_len, factor)
            t = jnp.swapaxes(t, -1, -2)
        t = t.reshape(b, num_heads, cp * factor, s_len)
        if s_pad > s_len:   # zero columns: contribute 0 to norms/dots, sliced off after attn
            t = jnp.pad(t, ((0, 0), (0, 0), (0, 0), (0, s_pad - s_len)))
        return t

    def from_heads(t, box):
        t = t[..., :s_len]
        t = t.reshape(b, num_heads, cp, factor, s_len)
        if not box:
            t = jnp.swapaxes(t, -1, -2)
        t = t.reshape(b, c, hw_p)
        return t[:, :, :hw] if pad_n else t

    q_all = jnp.concatenate([to_heads(q1_s, True), to_heads(q2_s, False)], axis=0)
    k_all = jnp.concatenate([to_heads(k1_s, True), to_heads(k2_s, False)], axis=0)
    v_all = jnp.concatenate([to_heads(v_s, True), to_heads(v_s, False)], axis=0)

    if use_pallas:
        o_all = _attn_pallas(q_all, k_all, v_all, temperature)
    else:
        o_all = _attn_ref(q_all, k_all, v_all, temperature)

    out1 = from_heads(o_all[:b], True)
    out2 = from_heads(o_all[b:], False)

    # -- scatter back to the un-sorted spatial order (inverse permutation) --
    inv = jnp.argsort(idx, axis=-1)
    out1 = jnp.take_along_axis(out1, inv, axis=-1)
    out2 = jnp.take_along_axis(out2, inv, axis=-1)

    # -- fused elementwise product + 1x1 projection --
    w_proj2 = w_proj.reshape(c, c)
    if use_pallas:
        out = _proj_pallas(out1, out2, w_proj2)
    else:
        out = _proj_ref(out1, out2, w_proj2)
    out = out.reshape(b, c, h, w)

    # -- undo the channel-half spatial sorts on the output --
    out_half = out[:, :ch]
    out_half = jnp.take_along_axis(out_half, jnp.argsort(idx_w, axis=-1), axis=-1)
    out_half = jnp.take_along_axis(out_half, jnp.argsort(idx_h, axis=-2), axis=-2)
    return jnp.concatenate([out_half, out[:, ch:]], axis=1)


# ----------------------------------------------------------------------------
if __name__ == "__main__":
    num_heads = 4
    b, dim, h, w = 2, 4, 16, 16      # DHSA(dim=4, num_heads=4), x: (2, 4, 16, 16)

    key = jax.random.PRNGKey(0)
    kx, k1, k2, k3, k4, k5, k6, k7 = jax.random.split(key, 8)

    x = jax.random.normal(kx, (b, dim, h, w), dtype=jnp.float32)
    w_qkv = jax.random.normal(k1, (dim * 5, dim, 1, 1), dtype=jnp.float32) * 0.2
    w_dw = jax.random.normal(k2, (dim * 5, 1, 3, 3), dtype=jnp.float32) * 0.2
    w_proj = jax.random.normal(k3, (dim, dim, 1, 1), dtype=jnp.float32) * 0.2
    temperature = 1.0 + 0.1 * jax.random.normal(k4, (num_heads, 1, 1), dtype=jnp.float32)
    params = (w_qkv, w_dw, w_proj, temperature)

    # --- end-to-end forward with the Pallas kernels ---
    fwd = jax.jit(functools.partial(dhsa_forward, num_heads=num_heads, use_pallas=True))
    out = jax.block_until_ready(fwd(x, params))
    assert out.shape == (b, dim, h, w)
    assert bool(jnp.all(jnp.isfinite(out)))

    # --- block-level numerical checks against pure-f32 JAX references ---
    # (bf16 MXU inputs inside the kernels -> relaxed tolerances; per-block comparison
    #  because the module's data-dependent argsort makes end-to-end comparison
    #  discontinuous under float rounding differences)
    qkv_pl = _qkv_dw_pallas(x, w_qkv, w_dw)
    qkv_ref = _qkv_dw_ref(x, w_qkv, w_dw)
    assert bool(jnp.allclose(qkv_pl, qkv_ref, atol=5e-2, rtol=5e-2)), "qkv+dwconv mismatch"

    s_test = 128
    qa = jax.random.normal(k5, (2 * b, num_heads, dim, s_test), dtype=jnp.float32)
    ka = jax.random.normal(k6, (2 * b, num_heads, dim, s_test), dtype=jnp.float32)
    va = jax.random.normal(k7, (2 * b, num_heads, dim, s_test), dtype=jnp.float32)
    at_pl = _attn_pallas(qa, ka, va, temperature)
    at_ref = _attn_ref(qa, ka, va, temperature)
    assert bool(jnp.allclose(at_pl, at_ref, atol=5e-2, rtol=5e-2)), "attention mismatch"

    a1 = qkv_ref.reshape(b, 5 * dim, h * w)[:, :dim]
    a2 = qkv_ref.reshape(b, 5 * dim, h * w)[:, dim:2 * dim]
    pr_pl = _proj_pallas(a1, a2, w_proj.reshape(dim, dim))
    pr_ref = _proj_ref(a1, a2, w_proj.reshape(dim, dim))
    assert bool(jnp.allclose(pr_pl, pr_ref, atol=5e-2, rtol=5e-2)), "projection mismatch"

    print("KERNEL_OK")
</pallas_src>

<mosaic_0001>
module attributes {stable_mosaic.version = 11 : i64} {
  func.func @kernel(%arg0: i32, %arg1: memref<1x4x384xf32, #tpu.memory_space<vmem>>, %arg2: memref<20x4xf32, #tpu.memory_space<vmem>>, %arg3: memref<20x9xf32, #tpu.memory_space<vmem>>, %arg4: memref<1x20x384xf32, #tpu.memory_space<vmem>>, %arg5: memref<20x384xf32, #tpu.memory_space<vmem>>) attributes {dimension_semantics = [#tpu.dimension_semantics<parallel>], iteration_bounds = array<i64: 2>, scalar_prefetch = 0 : i64, scratch_operands = 1 : i64, tpu.core_type = #tpu.core_type<tc>, window_params = [{transform_indices = @transform_0, window_bounds = array<i64: 1, 4, 384>}, {pipeline_mode = #tpu.pipeline_mode<synchronous>, transform_indices = @transform_1, window_bounds = array<i64: 20, 4>}, {pipeline_mode = #tpu.pipeline_mode<synchronous>, transform_indices = @transform_2, window_bounds = array<i64: 20, 9>}, {transform_indices = @transform_3, window_bounds = array<i64: 1, 20, 384>}]} {
    %c0 = arith.constant 0 : index
    %c0_0 = arith.constant 0 : index
    %c0_1 = arith.constant 0 : index
    %0 = vector.load %arg1[%c0, %c0_0, %c0_1] : memref<1x4x384xf32, #tpu.memory_space<vmem>>, vector<1x4x384xf32>
    %1 = vector.shape_cast %0 : vector<1x4x384xf32> to vector<4x384xf32>
    %2 = arith.truncf %1 : vector<4x384xf32> to vector<4x384xbf16>
    %c0_2 = arith.constant 0 : index
    %c0_3 = arith.constant 0 : index
    %3 = vector.load %arg2[%c0_2, %c0_3] : memref<20x4xf32, #tpu.memory_space<vmem>>, vector<20x4xf32>
    %4 = arith.truncf %3 : vector<20x4xf32> to vector<20x4xbf16>
    %cst = arith.constant dense<0.000000e+00> : vector<20x384xf32>
    %5 = tpu.matmul %4, %2, %cst {dimension_numbers = #tpu.dot_dimension_numbers<[1], [0], [0], [1], [0, 0, 1, 1], [], []>} : vector<20x4xbf16>, vector<4x384xbf16>, vector<20x384xf32> -> vector<20x384xf32>
    %c0_4 = arith.constant 0 : index
    %c0_5 = arith.constant 0 : index
    %6 = vector.load %arg5[%c0_4, %c0_5] : memref<20x384xf32, #tpu.memory_space<vmem>>, vector<20x384xf32>
    tpu.vector_store %arg5[%c0_4, %c0_5], %5 {strides = array<i32>} : memref<20x384xf32, #tpu.memory_space<vmem>>, vector<20x384xf32>,
    %c0_6 = arith.constant 0 : index
    %c0_7 = arith.constant 0 : index
    %7 = vector.load %arg5[%c0_6, %c0_7] : memref<20x384xf32, #tpu.memory_space<vmem>>, vector<20x384xf32>
    %c0_8 = arith.constant 0 : index
    %c0_9 = arith.constant 0 : index
    %8 = vector.load %arg3[%c0_8, %c0_9] : memref<20x9xf32, #tpu.memory_space<vmem>>, vector<20x9xf32>
    %cst_10 = arith.constant 0.000000e+00 : f32
    %9 = vector.broadcast %cst_10 : f32 to vector<20x384xf32>
    %cst_11 = arith.constant 0.000000e+00 : f32
    %10 = vector.broadcast %cst_11 : f32 to vector<20x19xf32>
    %11 = vector.extract_strided_slice %7 {offsets = [0, 0], sizes = [20, 365], strides = [1, 1]} : vector<20x384xf32> to vector<20x365xf32>
    %12 = tpu.concatenate %10, %11 in 1 : vector<20x19xf32>, vector<20x365xf32> -> vector<20x384xf32>
    %13 = vector.extract_strided_slice %8 {offsets = [0, 0], sizes = [20, 1], strides = [1, 1]} : vector<20x9xf32> to vector<20x1xf32>
    %14 = vector.broadcast %13 : vector<20x1xf32> to vector<20x384xf32>
    %15 = arith.mulf %12, %14 : vector<20x384xf32>
    %16 = arith.addf %9, %15 : vector<20x384xf32>
    %cst_12 = arith.constant 0.000000e+00 : f32
    %17 = vector.broadcast %cst_12 : f32 to vector<20x18xf32>
    %18 = vector.extract_strided_slice %7 {offsets = [0, 0], sizes = [20, 366], strides = [1, 1]} : vector<20x384xf32> to vector<20x366xf32>
    %19 = tpu.concatenate %17, %18 in 1 : vector<20x18xf32>, vector<20x366xf32> -> vector<20x384xf32>
    %20 = vector.extract_strided_slice %8 {offsets = [0, 1], sizes = [20, 1], strides = [1, 1]} : vector<20x9xf32> to vector<20x1xf32>
    %21 = vector.broadcast %20 : vector<20x1xf32> to vector<20x384xf32>
    %22 = arith.mulf %19, %21 : vector<20x384xf32>
    %23 = arith.addf %16, %22 : vector<20x384xf32>
    %cst_13 = arith.constant 0.000000e+00 : f32
    %24 = vector.broadcast %cst_13 : f32 to vector<20x17xf32>
    %25 = vector.extract_strided_slice %7 {offsets = [0, 0], sizes = [20, 367], strides = [1, 1]} : vector<20x384xf32> to vector<20x367xf32>
    %26 = tpu.concatenate %24, %25 in 1 : vector<20x17xf32>, vector<20x367xf32> -> vector<20x384xf32>
    %27 = vector.extract_strided_slice %8 {offsets = [0, 2], sizes = [20, 1], strides = [1, 1]} : vector<20x9xf32> to vector<20x1xf32>
    %28 = vector.broadcast %27 : vector<20x1xf32> to vector<20x384xf32>
    %29 = arith.mulf %26, %28 : vector<20x384xf32>
    %30 = arith.addf %23, %29 : vector<20x384xf32>
    %cst_14 = arith.constant 0.000000e+00 : f32
    %31 = vector.broadcast %cst_14 : f32 to vector<20x1xf32>
    %32 = vector.extract_strided_slice %7 {offsets = [0, 0], sizes = [20, 383], strides = [1, 1]} : vector<20x384xf32> to vector<20x383xf32>
    %33 = tpu.concatenate %31, %32 in 1 : vector<20x1xf32>, vector<20x383xf32> -> vector<20x384xf32>
    %34 = vector.extract_strided_slice %8 {offsets = [0, 3], sizes = [20, 1], strides = [1, 1]} : vector<20x9xf32> to vector<20x1xf32>
    %35 = vector.broadcast %34 : vector<20x1xf32> to vector<20x384xf32>
    %36 = arith.mulf %33, %35 : vector<20x384xf32>
    %37 = arith.addf %30, %36 : vector<20x384xf32>
    %38 = vector.extract_strided_slice %8 {offsets = [0, 4], sizes = [20, 1], strides = [1, 1]} : vector<20x9xf32> to vector<20x1xf32>
    %39 = vector.broadcast %38 : vector<20x1xf32> to vector<20x384xf32>
    %40 = arith.mulf %7, %39 : vector<20x384xf32>
    %41 = arith.addf %37, %40 : vector<20x384xf32>
    %42 = vector.extract_strided_slice %7 {offsets = [0, 1], sizes = [20, 383], strides = [1, 1]} : vector<20x384xf32> to vector<20x383xf32>
    %cst_15 = arith.constant 0.000000e+00 : f32
    %43 = vector.broadcast %cst_15 : f32 to vector<20x1xf32>
    %44 = tpu.concatenate %42, %43 in 1 : vector<20x383xf32>, vector<20x1xf32> -> vector<20x384xf32>
    %45 = vector.extract_strided_slice %8 {offsets = [0, 5], sizes = [20, 1], strides = [1, 1]} : vector<20x9xf32> to vector<20x1xf32>
    %46 = vector.broadcast %45 : vector<20x1xf32> to vector<20x384xf32>
    %47 = arith.mulf %44, %46 : vector<20x384xf32>
    %48 = arith.addf %41, %47 : vector<20x384xf32>
    %49 = vector.extract_strided_slice %7 {offsets = [0, 17], sizes = [20, 367], strides = [1, 1]} : vector<20x384xf32> to vector<20x367xf32>
    %cst_16 = arith.constant 0.000000e+00 : f32
    %50 = vector.broadcast %cst_16 : f32 to vector<20x17xf32>
    %51 = tpu.concatenate %49, %50 in 1 : vector<20x367xf32>, vector<20x17xf32> -> vector<20x384xf32>
    %52 = vector.extract_strided_slice %8 {offsets = [0, 6], sizes = [20, 1], strides = [1, 1]} : vector<20x9xf32> to vector<20x1xf32>
    %53 = vector.broadcast %52 : vector<20x1xf32> to vector<20x384xf32>
    %54 = arith.mulf %51, %53 : vector<20x384xf32>
    %55 = arith.addf %48, %54 : vector<20x384xf32>
    %56 = vector.extract_strided_slice %7 {offsets = [0, 18], sizes = [20, 366], strides = [1, 1]} : vector<20x384xf32> to vector<20x366xf32>
    %cst_17 = arith.constant 0.000000e+00 : f32
    %57 = vector.broadcast %cst_17 : f32 to vector<20x18xf32>
    %58 = tpu.concatenate %56, %57 in 1 : vector<20x366xf32>, vector<20x18xf32> -> vector<20x384xf32>
    %59 = vector.extract_strided_slice %8 {offsets = [0, 7], sizes = [20, 1], strides = [1, 1]} : vector<20x9xf32> to vector<20x1xf32>
    %60 = vector.broadcast %59 : vector<20x1xf32> to vector<20x384xf32>
    %61 = arith.mulf %58, %60 : vector<20x384xf32>
    %62 = arith.addf %55, %61 : vector<20x384xf32>
    %63 = vector.extract_strided_slice %7 {offsets = [0, 19], sizes = [20, 365], strides = [1, 1]} : vector<20x384xf32> to vector<20x365xf32>
    %cst_18 = arith.constant 0.000000e+00 : f32
    %64 = vector.broadcast %cst_18 : f32 to vector<20x19xf32>
    %65 = tpu.concatenate %63, %64 in 1 : vector<20x365xf32>, vector<20x19xf32> -> vector<20x384xf32>
    %66 = vector.extract_strided_slice %8 {offsets = [0, 8], sizes = [20, 1], strides = [1, 1]} : vector<20x9xf32> to vector<20x1xf32>
    %67 = vector.broadcast %66 : vector<20x1xf32> to vector<20x384xf32>
    %68 = arith.mulf %65, %67 : vector<20x384xf32>
    %69 = arith.addf %62, %68 : vector<20x384xf32>
    %c0_19 = arith.constant 0 : index
    %c0_20 = arith.constant 0 : index
    %c0_21 = arith.constant 0 : index
    %70 = vector.load %arg4[%c0_19, %c0_20, %c0_21] : memref<1x20x384xf32, #tpu.memory_space<vmem>>, vector<1x20x384xf32>
    %71 = vector.shape_cast %70 : vector<1x20x384xf32> to vector<20x384xf32>
    %72 = vector.shape_cast %69 : vector<20x384xf32> to vector<1x20x384xf32>
    tpu.vector_store %arg4[%c0_19, %c0_20, %c0_21], %72 {strides = array<i32>} : memref<1x20x384xf32, #tpu.memory_space<vmem>>, vector<1x20x384xf32>,
    return
  }
  func.func @transform_0(%arg0: i32) -> (i32, i32, i32) {
    %c0_i32 = arith.constant 0 : i32
    %c0_i32_0 = arith.constant 0 : i32
    %c0_i32_1 = arith.constant 0 : i32
    return %arg0, %c0_i32, %c0_i32_0 : i32, i32, i32
  }
  func.func @transform_1(%arg0: i32) -> (i32, i32) {
    %c0_i32 = arith.constant 0 : i32
    %c0_i32_0 = arith.constant 0 : i32
    %c0_i32_1 = arith.constant 0 : i32
    return %c0_i32, %c0_i32_0 : i32, i32
  }
  func.func @transform_2(%arg0: i32) -> (i32, i32) {
    %c0_i32 = arith.constant 0 : i32
    %c0_i32_0 = arith.constant 0 : i32
    %c0_i32_1 = arith.constant 0 : i32
    return %c0_i32, %c0_i32_0 : i32, i32
  }
  func.func @transform_3(%arg0: i32) -> (i32, i32, i32) {
    %c0_i32 = arith.constant 0 : i32
    %c0_i32_0 = arith.constant 0 : i32
    %c0_i32_1 = arith.constant 0 : i32
    return %arg0, %c0_i32, %c0_i32_0 : i32, i32, i32
  }
}

module attributes {stable_mosaic.version = 11 : i64} {
  func.func @_attn_kernel(%arg0: i32, %arg1: memref<16x1xf32, #tpu.memory_space<vmem>>, %arg2: memref<16x16xf32, #tpu.memory_space<vmem>>, %arg3: memref<1x16x128xf32, #tpu.memory_space<vmem>>, %arg4: memref<1x16x128xf32, #tpu.memory_space<vmem>>, %arg5: memref<1x16x128xf32, #tpu.memory_space<vmem>>, %arg6: memref<1x16x128xf32, #tpu.memory_space<vmem>>) attributes {dimension_semantics = [#tpu.dimension_semantics<parallel>], iteration_bounds = array<i64: 4>, scalar_prefetch = 0 : i64, scratch_operands = 0 : i64, tpu.core_type = #tpu.core_type<tc>, window_params = [{pipeline_mode = #tpu.pipeline_mode<synchronous>, transform_indices = @transform_0, window_bounds = array<i64: 16, 1>}, {pipeline_mode = #tpu.pipeline_mode<synchronous>, transform_indices = @transform_1, window_bounds = array<i64: 16, 16>}, {transform_indices = @transform_2, window_bounds = array<i64: 1, 16, 128>}, {transform_indices = @transform_3, window_bounds = array<i64: 1, 16, 128>}, {transform_indices = @transform_4, window_bounds = array<i64: 1, 16, 128>}, {transform_indices = @transform_5, window_bounds = array<i64: 1, 16, 128>}]} {
    %c0 = arith.constant 0 : index
    %c0_0 = arith.constant 0 : index
    %c0_1 = arith.constant 0 : index
    %0 = vector.load %arg3[%c0, %c0_0, %c0_1] : memref<1x16x128xf32, #tpu.memory_space<vmem>>, vector<1x16x128xf32>
    %1 = vector.shape_cast %0 : vector<1x16x128xf32> to vector<16x128xf32>
    %c0_2 = arith.constant 0 : index
    %c0_3 = arith.constant 0 : index
    %c0_4 = arith.constant 0 : index
    %2 = vector.load %arg4[%c0_2, %c0_3, %c0_4] : memref<1x16x128xf32, #tpu.memory_space<vmem>>, vector<1x16x128xf32>
    %3 = vector.shape_cast %2 : vector<1x16x128xf32> to vector<16x128xf32>
    %c0_5 = arith.constant 0 : index
    %c0_6 = arith.constant 0 : index
    %c0_7 = arith.constant 0 : index
    %4 = vector.load %arg5[%c0_5, %c0_6, %c0_7] : memref<1x16x128xf32, #tpu.memory_space<vmem>>, vector<1x16x128xf32>
    %5 = vector.shape_cast %4 : vector<1x16x128xf32> to vector<16x128xf32>
    %6 = arith.mulf %1, %1 : vector<16x128xf32>
    %cst = arith.constant dense<0.000000e+00> : vector<16xf32>
    %7 = vector.multi_reduction <add>, %6, %cst [1] : vector<16x128xf32> to vector<16xf32>
    %8 = vector.shape_cast %7 : vector<16xf32> to vector<16x1xf32>
    %cst_8 = arith.constant 1.000000e-24 : f32
    %9 = vector.broadcast %cst_8 : f32 to vector<16x1xf32>
    %10 = arith.maximumf %8, %9 : vector<16x1xf32>
    %11 = math.rsqrt %10 : vector<16x1xf32>
    %12 = arith.mulf %3, %3 : vector<16x128xf32>
    %cst_9 = arith.constant dense<0.000000e+00> : vector<16xf32>
    %13 = vector.multi_reduction <add>, %12, %cst_9 [1] : vector<16x128xf32> to vector<16xf32>
    %14 = vector.shape_cast %13 : vector<16xf32> to vector<16x1xf32>
    %cst_10 = arith.constant 1.000000e-24 : f32
    %15 = vector.broadcast %cst_10 : f32 to vector<16x1xf32>
    %16 = arith.maximumf %14, %15 : vector<16x1xf32>
    %17 = math.rsqrt %16 : vector<16x1xf32>
    %18 = vector.broadcast %11 : vector<16x1xf32> to vector<16x128xf32>
    %19 = arith.mulf %1, %18 : vector<16x128xf32>
    %20 = arith.truncf %19 : vector<16x128xf32> to vector<16x128xbf16>
    %21 = vector.broadcast %17 : vector<16x1xf32> to vector<16x128xf32>
    %22 = arith.mulf %3, %21 : vector<16x128xf32>
    %23 = arith.truncf %22 : vector<16x128xf32> to vector<16x128xbf16>
    %cst_11 = arith.constant dense<0.000000e+00> : vector<16x16xf32>
    %24 = tpu.matmul %20, %23, %cst_11 {dimension_numbers = #tpu.dot_dimension_numbers<[1], [1], [0], [0], [0, 0, 1, 0], [], []>} : vector<16x128xbf16>, vector<16x128xbf16>, vector<16x16xf32> -> vector<16x16xf32>
    %c0_12 = arith.constant 0 : index
    %c0_13 = arith.constant 0 : index
    %25 = vector.load %arg1[%c0_12, %c0_13] : memref<16x1xf32, #tpu.memory_space<vmem>>, vector<16x1xf32>
    %26 = vector.broadcast %25 : vector<16x1xf32> to vector<16x16xf32>
    %27 = arith.mulf %24, %26 : vector<16x16xf32>
    %28 = math.exp %27 : vector<16x16xf32>
    %c0_14 = arith.constant 0 : index
    %c0_15 = arith.constant 0 : index
    %29 = vector.load %arg2[%c0_14, %c0_15] : memref<16x16xf32, #tpu.memory_space<vmem>>, vector<16x16xf32>
    %30 = arith.mulf %28, %29 : vector<16x16xf32>
    %cst_16 = arith.constant dense<0.000000e+00> : vector<16xf32>
    %31 = vector.multi_reduction <add>, %30, %cst_16 [1] : vector<16x16xf32> to vector<16xf32>
    %32 = vector.shape_cast %31 : vector<16xf32> to vector<16x1xf32>
    %cst_17 = arith.constant 1.000000e+00 : f32
    %33 = vector.broadcast %cst_17 : f32 to vector<16x1xf32>
    %34 = arith.addf %32, %33 : vector<16x1xf32>
    %35 = tpu.reciprocal %34 {approx = true} : vector<16x1xf32> -> vector<16x1xf32>
    %36 = vector.broadcast %35 : vector<16x1xf32> to vector<16x16xf32>
    %37 = arith.mulf %30, %36 : vector<16x16xf32>
    %38 = arith.truncf %37 : vector<16x16xf32> to vector<16x16xbf16>
    %39 = arith.truncf %5 : vector<16x128xf32> to vector<16x128xbf16>
    %cst_18 = arith.constant dense<0.000000e+00> : vector<16x128xf32>
    %40 = tpu.matmul %38, %39, %cst_18 {dimension_numbers = #tpu.dot_dimension_numbers<[1], [0], [0], [1], [0, 0, 1, 1], [], []>} : vector<16x16xbf16>, vector<16x128xbf16>, vector<16x128xf32> -> vector<16x128xf32>
    %c0_19 = arith.constant 0 : index
    %c0_20 = arith.constant 0 : index
    %c0_21 = arith.constant 0 : index
    %41 = vector.load %arg6[%c0_19, %c0_20, %c0_21] : memref<1x16x128xf32, #tpu.memory_space<vmem>>, vector<1x16x128xf32>
    %42 = vector.shape_cast %41 : vector<1x16x128xf32> to vector<16x128xf32>
    %43 = vector.shape_cast %40 : vector<16x128xf32> to vector<1x16x128xf32>
    tpu.vector_store %arg6[%c0_19, %c0_20, %c0_21], %43 {strides = array<i32>} : memref<1x16x128xf32, #tpu.memory_space<vmem>>, vector<1x16x128xf32>,
    return
  }
  func.func @transform_0(%arg0: i32) -> (i32, i32) {
    %c0_i32 = arith.constant 0 : i32
    %c0_i32_0 = arith.constant 0 : i32
    %c0_i32_1 = arith.constant 0 : i32
    return %c0_i32, %c0_i32_0 : i32, i32
  }
  func.func @transform_1(%arg0: i32) -> (i32, i32) {
    %c0_i32 = arith.constant 0 : i32
    %c0_i32_0 = arith.constant 0 : i32
    %c0_i32_1 = arith.constant 0 : i32
    return %c0_i32, %c0_i32_0 : i32, i32
  }
  func.func @transform_2(%arg0: i32) -> (i32, i32, i32) {
    %c0_i32 = arith.constant 0 : i32
    %c0_i32_0 = arith.constant 0 : i32
    %c0_i32_1 = arith.constant 0 : i32
    return %arg0, %c0_i32, %c0_i32_0 : i32, i32, i32
  }
  func.func @transform_3(%arg0: i32) -> (i32, i32, i32) {
    %c0_i32 = arith.constant 0 : i32
    %c0_i32_0 = arith.constant 0 : i32
    %c0_i32_1 = arith.constant 0 : i32
    return %arg0, %c0_i32, %c0_i32_0 : i32, i32, i32
  }
  func.func @transform_4(%arg0: i32) -> (i32, i32, i32) {
    %c0_i32 = arith.constant 0 : i32
    %c0_i32_0 = arith.constant 0 : i32
    %c0_i32_1 = arith.constant 0 : i32
    return %arg0, %c0_i32, %c0_i32_0 : i32, i32, i32
  }
  func.func @transform_5(%arg0: i32) -> (i32, i32, i32) {
    %c0_i32 = arith.constant 0 : i32
    %c0_i32_0 = arith.constant 0 : i32
    %c0_i32_1 = arith.constant 0 : i32
    return %arg0, %c0_i32, %c0_i32_0 : i32, i32, i32
  }
}

module attributes {stable_mosaic.version = 11 : i64} {
  func.func @_proj_kernel(%arg0: i32, %arg1: memref<1x4x256xf32, #tpu.memory_space<vmem>>, %arg2: memref<1x4x256xf32, #tpu.memory_space<vmem>>, %arg3: memref<4x4xf32, #tpu.memory_space<vmem>>, %arg4: memref<1x4x256xf32, #tpu.memory_space<vmem>>) attributes {dimension_semantics = [#tpu.dimension_semantics<parallel>], iteration_bounds = array<i64: 2>, scalar_prefetch = 0 : i64, scratch_operands = 0 : i64, tpu.core_type = #tpu.core_type<tc>, window_params = [{transform_indices = @transform_0, window_bounds = array<i64: 1, 4, 256>}, {transform_indices = @transform_1, window_bounds = array<i64: 1, 4, 256>}, {pipeline_mode = #tpu.pipeline_mode<synchronous>, transform_indices = @transform_2, window_bounds = array<i64: 4, 4>}, {transform_indices = @transform_3, window_bounds = array<i64: 1, 4, 256>}]} {
    %c0 = arith.constant 0 : index
    %c0_0 = arith.constant 0 : index
    %c0_1 = arith.constant 0 : index
    %0 = vector.load %arg1[%c0, %c0_0, %c0_1] : memref<1x4x256xf32, #tpu.memory_space<vmem>>, vector<1x4x256xf32>
    %1 = vector.shape_cast %0 : vector<1x4x256xf32> to vector<4x256xf32>
    %c0_2 = arith.constant 0 : index
    %c0_3 = arith.constant 0 : index
    %c0_4 = arith.constant 0 : index
    %2 = vector.load %arg2[%c0_2, %c0_3, %c0_4] : memref<1x4x256xf32, #tpu.memory_space<vmem>>, vector<1x4x256xf32>
    %3 = vector.shape_cast %2 : vector<1x4x256xf32> to vector<4x256xf32>
    %4 = arith.mulf %1, %3 : vector<4x256xf32>
    %5 = arith.truncf %4 : vector<4x256xf32> to vector<4x256xbf16>
    %c0_5 = arith.constant 0 : index
    %c0_6 = arith.constant 0 : index
    %6 = vector.load %arg3[%c0_5, %c0_6] : memref<4x4xf32, #tpu.memory_space<vmem>>, vector<4x4xf32>
    %7 = arith.truncf %6 : vector<4x4xf32> to vector<4x4xbf16>
    %cst = arith.constant dense<0.000000e+00> : vector<4x256xf32>
    %8 = tpu.matmul %7, %5, %cst {dimension_numbers = #tpu.dot_dimension_numbers<[1], [0], [0], [1], [0, 0, 1, 1], [], []>} : vector<4x4xbf16>, vector<4x256xbf16>, vector<4x256xf32> -> vector<4x256xf32>
    %c0_7 = arith.constant 0 : index
    %c0_8 = arith.constant 0 : index
    %c0_9 = arith.constant 0 : index
    %9 = vector.load %arg4[%c0_7, %c0_8, %c0_9] : memref<1x4x256xf32, #tpu.memory_space<vmem>>, vector<1x4x256xf32>
    %10 = vector.shape_cast %9 : vector<1x4x256xf32> to vector<4x256xf32>
    %11 = vector.shape_cast %8 : vector<4x256xf32> to vector<1x4x256xf32>
    tpu.vector_store %arg4[%c0_7, %c0_8, %c0_9], %11 {strides = array<i32>} : memref<1x4x256xf32, #tpu.memory_space<vmem>>, vector<1x4x256xf32>,
    return
  }
  func.func @transform_0(%arg0: i32) -> (i32, i32, i32) {
    %c0_i32 = arith.constant 0 : i32
    %c0_i32_0 = arith.constant 0 : i32
    %c0_i32_1 = arith.constant 0 : i32
    return %arg0, %c0_i32, %c0_i32_0 : i32, i32, i32
  }
  func.func @transform_1(%arg0: i32) -> (i32, i32, i32) {
    %c0_i32 = arith.constant 0 : i32
    %c0_i32_0 = arith.constant 0 : i32
    %c0_i32_1 = arith.constant 0 : i32
    return %arg0, %c0_i32, %c0_i32_0 : i32, i32, i32
  }
  func.func @transform_2(%arg0: i32) -> (i32, i32) {
    %c0_i32 = arith.constant 0 : i32
    %c0_i32_0 = arith.constant 0 : i32
    %c0_i32_1 = arith.constant 0 : i32
    return %c0_i32, %c0_i32_0 : i32, i32
  }
  func.func @transform_3(%arg0: i32) -> (i32, i32, i32) {
    %c0_i32 = arith.constant 0 : i32
    %c0_i32_0 = arith.constant 0 : i32
    %c0_i32_1 = arith.constant 0 : i32
    return %arg0, %c0_i32, %c0_i32_0 : i32, i32, i32
  }
}

</mosaic_0001>

<llo_original>
// kernel: dhsa_forward.3
$region0: #{dhsa_forward.3}
  #allocation0 [shape = 'u32[]', space=smem, size = 0x4, offset = 0x4, fixed_abs, tag = 'smem constant byte address 0x4 - core index']
  #allocation1 [shape = 'u32[72,128]{1,0:T(1,128)}', space=vmem, size = 0x9000, scoped, tag = 'internal scratch']
  #allocation2 [shape = 'f32[20,384]{1,0:T(8,128)}', space=vmem, size = 0x9000, scoped, tag = 'scratch operand']
  %s0 = inlined_call_operand.vmem [shape: f32[2,4,384], index: 0, kind: input, shape index: {}]
  %s1 = inlined_call_operand.vmem [shape: f32[20,4], index: 1, kind: input, shape index: {}]
  %s2 = inlined_call_operand.vmem [shape: f32[20,9], index: 2, kind: input, shape index: {}]
  %s3 = inlined_call_operand.vmem [shape: f32[2,20,384], index: 3, kind: output, shape index: {}]
  %s4 = sld [smem:[#allocation0]]
  $region45: #{dhsa_forward.3} parent=0
    _
  %s6 = ssub.s32 1, %s4
  %s7 = scalar_select 0, %s6, %s4
  loop: start=0, step=1, limit=4
  $region2: #{dhsa_forward.3} parent=0 // loop_pre_header
    _
  $region3: #{dhsa_forward.3} parent=0 // loop_header
    %s9 = sphi 0, %s13
    %p10 = scmp.ge.s32.totalorder %s9, 4
    %s19 = sphi 0, %s21
    %s22 = sphi 0, %s19
    %s23 = sphi 0, %s22
    %s39 = sphi 0, %s23
    %s43 = sphi 0, %s43
    %s45 = sphi 0, %s43
    %s46 = sphi 0, %s45
    %s60 = sphi 0, %s46
    %s64 = sphi 0, %s64
    %s66 = sphi 0, %s64
    %s67 = sphi 0, %s66
    %s81 = sphi 0, %s67
    %s87 = sphi 0, %s89
    %s90 = sphi 0, %s87
    %s91 = sphi 0, %s90
    %s107 = sphi 0, %s91
  $region4: #{dhsa_forward.3} parent=0 // loop_header_branch
    %12 = sbr.rel (%p10) target = $region8
  $region5: #{dhsa_forward.3} parent=0 // loop_body
    %s14 = ssub.s32 %s9, 1
    %s15 = ssub.s32 %s9, 2
    %s16 = sadd.s32 %s9, 1
    %s17 = ssub.s32 %s9, %s16
    %p18 = scmp.eq.s32.totalorder %s17, 0
    %s20 = sadd.s32 %s19, 1
    %s21 = scalar_select %p18, %s19, %s20
    %p24 = pneg %p18
    %p25 = scmp.eq.s32.totalorder %s9, 1
    %p26 = por %p24, %p25
    %p27 = scmp.ne.s32.totalorder %s19, %s22
    %p28 = scmp.eq.s32.totalorder %s9, 0
    %p29 = por %p27, %p28
    %p30 = scmp.ne.s32.totalorder %s19, %s22
    %p31 = scmp.eq.s32.totalorder %s14, 1
    %p32 = por %p30, %p31
    %p33 = scmp.ne.s32.totalorder %s22, %s23
    %p34 = scmp.eq.s32.totalorder %s14, 0
    %p35 = por %p33, %p34
    %p36 = scmp.ne.s32.totalorder %s22, %s23
    %p37 = scmp.eq.s32.totalorder %s15, 1
    %p38 = por %p36, %p37
    %p40 = scmp.ne.s32.totalorder %s23, %s39
    %p41 = scmp.eq.s32.totalorder %s15, 0
    %p42 = por %p40, %p41
    %s44 = sadd.s32 %s43, 1
    %p47 = scmp.eq.s32.totalorder %s9, 1
    %p48 = scmp.ne.s32.totalorder %s43, %s45
    %p49 = scmp.eq.s32.totalorder %s9, 0
    %p50 = por %p48, %p49
    %p51 = scmp.ne.s32.totalorder %s43, %s45
    %p52 = scmp.eq.s32.totalorder %s14, 1
    %p53 = por %p51, %p52
    %p54 = scmp.ne.s32.totalorder %s45, %s46
    %p55 = scmp.eq.s32.totalorder %s14, 0
    %p56 = por %p54, %p55
    %p57 = scmp.ne.s32.totalorder %s45, %s46
    %p58 = scmp.eq.s32.totalorder %s15, 1
    %p59 = por %p57, %p58
    %p61 = scmp.ne.s32.totalorder %s46, %s60
    %p62 = scmp.eq.s32.totalorder %s15, 0
    %p63 = por %p61, %p62
    %s65 = sadd.s32 %s64, 1
    %p68 = scmp.eq.s32.totalorder %s9, 1
    %p69 = scmp.ne.s32.totalorder %s64, %s66
    %p70 = scmp.eq.s32.totalorder %s9, 0
    %p71 = por %p69, %p70
    %p72 = scmp.ne.s32.totalorder %s64, %s66
    %p73 = scmp.eq.s32.totalorder %s14, 1
    %p74 = por %p72, %p73
    %p75 = scmp.ne.s32.totalorder %s66, %s67
    %p76 = scmp.eq.s32.totalorder %s14, 0
    %p77 = por %p75, %p76
    %p78 = scmp.ne.s32.totalorder %s66, %s67
    %p79 = scmp.eq.s32.totalorder %s15, 1
    %p80 = por %p78, %p79
    %p82 = scmp.ne.s32.totalorder %s67, %s81
    %p83 = scmp.eq.s32.totalorder %s15, 0
    %p84 = por %p82, %p83
    %s85 = ssub.s32 %s9, %s16
    %p86 = scmp.eq.s32.totalorder %s85, 0
    %s88 = sadd.s32 %s87, 1
    %s89 = scalar_select %p86, %s87, %s88
    %p92 = pneg %p86
    %p93 = scmp.eq.s32.totalorder %s9, 1
    %p94 = por %p92, %p93
    %p95 = scmp.ne.s32.totalorder %s87, %s90
    %p96 = scmp.eq.s32.totalorder %s9, 0
    %p97 = por %p95, %p96
    %p98 = scmp.ne.s32.totalorder %s87, %s90
    %p99 = scmp.eq.s32.totalorder %s14, 1
    %p100 = por %p98, %p99
    %p101 = scmp.ne.s32.totalorder %s90, %s91
    %p102 = scmp.eq.s32.totalorder %s14, 0
    %p103 = por %p101, %p102
    %p104 = scmp.ne.s32.totalorder %s90, %s91
    %p105 = scmp.eq.s32.totalorder %s15, 1
    %p106 = por %p104, %p105
    %p108 = scmp.ne.s32.totalorder %s91, %s107
    %p109 = scmp.eq.s32.totalorder %s15, 0
    %p110 = por %p108, %p109
    %p111 = scmp.le.s32.totalorder 1, %s9
    %p112 = scmp.lt.s32.totalorder %s9, 3
    %p113 = pnand %p111, %p112
    %p114 = pneg %p113
    // Predicated region
    $region9: #{dhsa_forward.3} parent=5 // pred_check
      _
    $region10: #{dhsa_forward.3} parent=5 // pred_check_branch
      %116 = sbr.rel (%p113) target = $region12
    $region11: #{dhsa_forward.3} parent=5 // pred_region
      %s117 = ssub.s32 %s9, 1
      // Predicated region
      $region13: #{dhsa_forward.3} parent=11 // pred_check
        %p118 = pneg %p56
      $region14: #{dhsa_forward.3} parent=11 // pred_check_branch
        %120 = sbr.rel (%p118) target = $region16
      $region15: #{dhsa_forward.3} parent=11 // pred_region
        _
      $region16: #{dhsa_forward.3} parent=11 // pred_fallthru
        _
      // Predicated region
      $region17: #{dhsa_forward.3} parent=11 // pred_check
        %p121 = pneg %p77
      $region18: #{dhsa_forward.3} parent=11 // pred_check_branch
        %123 = sbr.rel (%p121) target = $region20
      $region19: #{dhsa_forward.3} parent=11 // pred_region
        _
      $region20: #{dhsa_forward.3} parent=11 // pred_fallthru
        _
    $region12: #{dhsa_forward.3} parent=5 // pred_fallthru
      _
    %p124 = scmp.lt.s32.totalorder %s9, 2
    // Predicated region
    $region21: #{dhsa_forward.3} parent=5 // pred_check
      %p125 = pneg %p124
    $region22: #{dhsa_forward.3} parent=5 // pred_check_branch
      %127 = sbr.rel (%p125) target = $region24
    $region23: #{dhsa_forward.3} parent=5 // pred_region
      // Predicated region
      $region25: #{dhsa_forward.3} parent=23 // pred_check
        %p128 = pneg %p29
      $region26: #{dhsa_forward.3} parent=23 // pred_check_branch
        %130 = sbr.rel (%p128) target = $region28
      $region27: #{dhsa_forward.3} parent=23 // pred_region
        %p131 = scmp.lt.s32.totalorder %s9, 1
        %s132 = scalar_select %p131, %s9, 1
        %s133 = smul.addr %s132, 3
        %s134 = smul.addr %s133, 4
        %s135 = scalar_lea.vmem %s0, %s134
      $region28: #{dhsa_forward.3} parent=23 // pred_fallthru
        _
    $region24: #{dhsa_forward.3} parent=5 // pred_fallthru
      _
    %p136 = scmp.le.s32.totalorder 1, %s9
    %p137 = scmp.lt.s32.totalorder %s9, 3
    %p138 = pnand %p136, %p137
    %p139 = pneg %p138
    // Predicated region
    $region29: #{dhsa_forward.3} parent=5 // pred_check
      _
    $region30: #{dhsa_forward.3} parent=5 // pred_check_branch
      %141 = sbr.rel (%p138) target = $region32
    $region31: #{dhsa_forward.3} parent=5 // pred_region
      %s142 = ssub.s32 %s9, 1
      %p143 = scmp.lt.s32.totalorder %s14, 1
      %s144 = scalar_select %p143, %s14, 1
      %s145 = smul.addr %s144, 3
      %s146 = smul.addr %s145, 4
      %s147 = scalar_lea.vmem %s0, %s146
      %p148 = pneg %p35
      %p149 = pneg %p32
      %p150 = pneg %p56
      %p151 = pneg %p53
      %p152 = pneg %p77
      %p153 = pneg %p74
      %p154 = pneg %p103
      %p155 = pneg %p100
      %p156 = scmp.lt.s32.totalorder %s14, 1
      %s157 = scalar_select %p156, %s14, 1
      %s158 = smul.addr %s157, 9
      %s159 = smul.addr %s158, 8
      %s160 = scalar_lea.vmem %s3, %s159
      %p161 = scmp.lt.s32.totalorder %s14, 1
      %s162 = scalar_select %p161, %s14, 1
      %s163 = smul.addr %s162, 3
      %s164 = smul.addr %s163, 4
      %s165 = scalar_lea.vmem %s0, %s164
      %p166 = scmp.lt.s32.totalorder %s14, 1
      %s167 = scalar_select %p166, %s14, 1
      %s168 = smul.addr %s167, 9
      %s169 = smul.addr %s168, 8
      %s170 = scalar_lea.vmem %s3, %s169
      %v172 = vld [vmem:[%s165] sm:$0xff]
      %v173 = vld [vmem:[%s165 + $0x8] sm:$0xf]
      %176 = vst [vmem:[#allocation1] ss:$2 sm:$0xff] %v172
      %s177 = scalar_lea.vmem [#allocation1], 16
      %178 = vst [vmem:[%s177] ss:$2 sm:$0xff] %v173
      %v179 = vld.sshfl [vmem:[#allocation1] sm:$0xff pattern:$0x75316420]
      %v180 = vld.sshfl [vmem:[#allocation1 + $0x8] sm:$0xff pattern:$0x75316420]
      %v181 = vld.sshfl [vmem:[#allocation1 + $0x10] sm:$0xff pattern:$0x75316420]
      %v185 = vpack.c.bf16 %v179, %v179
      %v186 = vpack.c.bf16 %v180, %v180
      %v187 = vpack.c.bf16 %v181, %v181
      %v188 = vld [vmem:[%s1] sm:$0xff]
      %v189 = vld [vmem:[%s1 + $0x8] sm:$0xff]
      %v190 = vld [vmem:[%s1 + $0x10] sm:$0xf]
      %v191 = vpack.c.bf16 %v189, %v188
      %v192 = vpack.c.bf16 %v190, %v190
      %vm193 = vcmask 31744
      %v195 = vsel %vm193, %v191, 0
      %v198 = vsel %vm193, %v192, 0
      %vm200 = vcmask 1041408
      %v202 = vsel %vm200, %v185, 0
      %v205 = vsel %vm200, %v186, 0
      %v208 = vsel %vm200, %v187, 0
      %210 = vmatpush.bf16.msra.mxu0 0
      %211 = vmatpush.bf16.msra.mxu0 0
      %212 = vmatpush.bf16.msra.mxu0 0
      %213 = vmatpush.bf16.msra.mxu0 0
      %214 = vmatpush.bf16.msra.mxu0 0
      %215 = vmatpush.bf16.msra.mxu0 0
      %216 = vmatpush.bf16.msra.mxu0 0
      %217 = vmatpush.bf16.msra.mxu0 %v202
      %218 = vmatmul.bf16.gmra.mxu0 %v195
      %v219 = vpop.f32.mrf.mxu0
      %v220 = vadd.f32 0.0, %v219
      %v221 = vpop.f32.mrf.mxu0
      %v222 = vadd.f32 0.0, %v221
      %223 = vmatmul.bf16.gmra.mxu0 %v198
      %v224 = vpop.f32.mrf.mxu0
      %v225 = vadd.f32 0.0, %v224
      %v226 = vpop.f32.mrf.mxu0
      %227 = vdwg.mxu0
      %228 = vmatpush.bf16.msra.mxu0 0
      %229 = vmatpush.bf16.msra.mxu0 0
      %230 = vmatpush.bf16.msra.mxu0 0
      %231 = vmatpush.bf16.msra.mxu0 0
      %232 = vmatpush.bf16.msra.mxu0 0
      %233 = vmatpush.bf16.msra.mxu0 0
      %234 = vmatpush.bf16.msra.mxu0 0
      %235 = vmatpush.bf16.msra.mxu0 %v205
      %236 = vmatmul.bf16.gmra.mxu0 %v195
      %v237 = vpop.f32.mrf.mxu0
      %v238 = vadd.f32 0.0, %v237
      %v239 = vpop.f32.mrf.mxu0
      %v240 = vadd.f32 0.0, %v239
      %241 = vmatmul.bf16.gmra.mxu0 %v198
      %v242 = vpop.f32.mrf.mxu0
      %v243 = vadd.f32 0.0, %v242
      %v244 = vpop.f32.mrf.mxu0
      %245 = vdwg.mxu0
      %246 = vmatpush.bf16.msra.mxu0 0
      %247 = vmatpush.bf16.msra.mxu0 0
      %248 = vmatpush.bf16.msra.mxu0 0
      %249 = vmatpush.bf16.msra.mxu0 0
      %250 = vmatpush.bf16.msra.mxu0 0
      %251 = vmatpush.bf16.msra.mxu0 0
      %252 = vmatpush.bf16.msra.mxu0 0
      %253 = vmatpush.bf16.msra.mxu0 %v208
      %254 = vmatmul.bf16.gmra.mxu0 %v195
      %v255 = vpop.f32.mrf.mxu0
      %v256 = vadd.f32 0.0, %v255
      %v257 = vpop.f32.mrf.mxu0
      %v258 = vadd.f32 0.0, %v257
      %259 = vmatmul.bf16.gmra.mxu0 %v198
      %v260 = vpop.f32.mrf.mxu0
      %v261 = vadd.f32 0.0, %v260
      %v262 = vpop.f32.mrf.mxu0
      %263 = vdwg.mxu0
      %264 = vst [vmem:[#allocation2] sm:$0xff] %v220
      %265 = vst [vmem:[#allocation2 + $0x8] sm:$0xff] %v238
      %266 = vst [vmem:[#allocation2 + $0x10] sm:$0xff] %v256
      %267 = vst [vmem:[#allocation2 + $0x18] sm:$0xff] %v222
      %268 = vst [vmem:[#allocation2 + $0x20] sm:$0xff] %v240
      %269 = vst [vmem:[#allocation2 + $0x28] sm:$0xff] %v258
      %270 = vst [vmem:[#allocation2 + $0x30] sm:$0xf] %v225
      %271 = vst [vmem:[#allocation2 + $0x38] sm:$0xf] %v243
      %272 = vst [vmem:[#allocation2 + $0x40] sm:$0xf] %v261
      %v273 = vld [vmem:[#allocation2] sm:$0xff]
      %v274 = vld [vmem:[#allocation2 + $0x8] sm:$0xff]
      %v275 = vld [vmem:[#allocation2 + $0x10] sm:$0xff]
      %v276 = vld [vmem:[#allocation2 + $0x18] sm:$0xff]
      %v277 = vld [vmem:[#allocation2 + $0x20] sm:$0xff]
      %v278 = vld [vmem:[#allocation2 + $0x28] sm:$0xff]
      %v279 = vld [vmem:[#allocation2 + $0x30] sm:$0xf]
      %v280 = vld [vmem:[#allocation2 + $0x38] sm:$0xf]
      %v281 = vld [vmem:[#allocation2 + $0x40] sm:$0xf]
      %v282 = vld [vmem:[%s2] sm:$0xff]
      %v283 = vld [vmem:[%s2 + $0x8] sm:$0xff]
      %v284 = vld [vmem:[%s2 + $0x10] sm:$0xf]
      %294 = vrot.lane.b32.xlu0 %v273, 19
      %v295 = vpop.permute.xlu0 %294
      %296 = vrot.lane.b32.xlu0 %v274, 19
      %v297 = vpop.permute.xlu0 %296
      %298 = vrot.lane.b32.xlu0 %v275, 19
      %v299 = vpop.permute.xlu0 %298
      %300 = vrot.lane.b32.xlu0 %v276, 19
      %v301 = vpop.permute.xlu0 %300
      %302 = vrot.lane.b32.xlu0 %v277, 19
      %v303 = vpop.permute.xlu0 %302
      %304 = vrot.lane.b32.xlu0 %v278, 19
      %v305 = vpop.permute.xlu0 %304
      %306 = vrot.lane.b32.xlu0 %v279, 19
      %v307 = vpop.permute.xlu0 %306
      %308 = vrot.lane.b32.xlu0 %v280, 19
      %v309 = vpop.permute.xlu0 %308
      %310 = vrot.lane.b32.xlu0 %v281, 19
      %v311 = vpop.permute.xlu0 %310
      %vm312 = vcmask 154624
      %v313 = vsel %vm312, %v295, %v297
      %v314 = vsel %vm312, %v297, %v299
      %v315 = vsel %vm312, %v301, %v303
      %v316 = vsel %vm312, %v303, %v305
      %v317 = vsel %vm312, %v307, %v309
      %v318 = vsel %vm312, %v309, %v311
      %v328 = vsel %vm312, 0.0, %v295
      %v329 = vsel %vm312, 0.0, %v301
      %v330 = vsel %vm312, 0.0, %v307
      %332 = vset.pattern.permute.xlu0 0
      %333 = vperm.xlu0 %332, %v282
      %v334 = vpop.permute.xlu0 %333
      %337 = vset.pattern.permute.xlu0 0
      %338 = vperm.xlu0 %337, %v283
      %v339 = vpop.permute.xlu0 %338
      %342 = vset.pattern.permute.xlu0 0
      %343 = vperm.xlu0 %342, %v284
      %v344 = vpop.permute.xlu0 %343
      %v346 = vmul.f32 %v328, %v334
      %v347 = vmul.f32 %v313, %v334
      %v348 = vmul.f32 %v314, %v334
      %v349 = vmul.f32 %v329, %v339
      %v350 = vmul.f32 %v315, %v339
      %v351 = vmul.f32 %v316, %v339
      %v352 = vmul.f32 %v330, %v344
      %v353 = vmul.f32 %v317, %v344
      %v354 = vmul.f32 %v318, %v344
      %v355 = vadd.f32 %v346, 0.0
      %v356 = vadd.f32 %v347, 0.0
      %v357 = vadd.f32 %v348, 0.0
      %v358 = vadd.f32 %v349, 0.0
      %v359 = vadd.f32 %v350, 0.0
      %v360 = vadd.f32 %v351, 0.0
      %v361 = vadd.f32 %v352, 0.0
      %v362 = vadd.f32 %v353, 0.0
      %v363 = vadd.f32 %v354, 0.0
      %364 = vrot.lane.b32.xlu0 %v273, 18
      %v365 = vpop.permute.xlu0 %364
      %366 = vrot.lane.b32.xlu0 %v274, 18
      %v367 = vpop.permute.xlu0 %366
      %368 = vrot.lane.b32.xlu0 %v275, 18
      %v369 = vpop.permute.xlu0 %368
      %370 = vrot.lane.b32.xlu0 %v276, 18
      %v371 = vpop.permute.xlu0 %370
      %372 = vrot.lane.b32.xlu0 %v277, 18
      %v373 = vpop.permute.xlu0 %372
      %374 = vrot.lane.b32.xlu0 %v278, 18
      %v375 = vpop.permute.xlu0 %374
      %376 = vrot.lane.b32.xlu0 %v279, 18
      %v377 = vpop.permute.xlu0 %376
      %378 = vrot.lane.b32.xlu0 %v280, 18
      %v379 = vpop.permute.xlu0 %378
      %380 = vrot.lane.b32.xlu0 %v281, 18
      %v381 = vpop.permute.xlu0 %380
      %vm382 = vcmask 146432
      %v383 = vsel %vm382, %v365, %v367
      %v384 = vsel %vm382, %v367, %v369
      %v385 = vsel %vm382, %v371, %v373
      %v386 = vsel %vm382, %v373, %v375
      %v387 = vsel %vm382, %v377, %v379
      %v388 = vsel %vm382, %v379, %v381
      %v398 = vsel %vm382, 0.0, %v365
      %v399 = vsel %vm382, 0.0, %v371
      %v400 = vsel %vm382, 0.0, %v377
      %401 = vset.pattern.permute.xlu0 1
      %402 = vperm.xlu0 %401, %v282
      %v403 = vpop.permute.xlu0 %402
      %405 = vset.pattern.permute.xlu0 1
      %406 = vperm.xlu0 %405, %v283
      %v407 = vpop.permute.xlu0 %406
      %409 = vset.pattern.permute.xlu0 1
      %410 = vperm.xlu0 %409, %v284
      %v411 = vpop.permute.xlu0 %410
      %v413 = vmul.f32 %v398, %v403
      %v414 = vmul.f32 %v383, %v403
      %v415 = vmul.f32 %v384, %v403
      %v416 = vmul.f32 %v399, %v407
      %v417 = vmul.f32 %v385, %v407
      %v418 = vmul.f32 %v386, %v407
      %v419 = vmul.f32 %v400, %v411
      %v420 = vmul.f32 %v387, %v411
      %v421 = vmul.f32 %v388, %v411
      %v422 = vadd.f32 %v355, %v413
      %v423 = vadd.f32 %v356, %v414
      %v424 = vadd.f32 %v357, %v415
      %v425 = vadd.f32 %v358, %v416
      %v426 = vadd.f32 %v359, %v417
      %v427 = vadd.f32 %v360, %v418
      %v428 = vadd.f32 %v361, %v419
      %v429 = vadd.f32 %v362, %v420
      %v430 = vadd.f32 %v363, %v421
      %431 = vrot.lane.b32.xlu0 %v273, 17
      %v432 = vpop.permute.xlu0 %431
      %433 = vrot.lane.b32.xlu0 %v274, 17
      %v434 = vpop.permute.xlu0 %433
      %435 = vrot.lane.b32.xlu0 %v275, 17
      %v436 = vpop.permute.xlu0 %435
      %437 = vrot.lane.b32.xlu0 %v276, 17
      %v438 = vpop.permute.xlu0 %437
      %439 = vrot.lane.b32.xlu0 %v277, 17
      %v440 = vpop.permute.xlu0 %439
      %441 = vrot.lane.b32.xlu0 %v278, 17
      %v442 = vpop.permute.xlu0 %441
      %443 = vrot.lane.b32.xlu0 %v279, 17
      %v444 = vpop.permute.xlu0 %443
      %445 = vrot.lane.b32.xlu0 %v280, 17
      %v446 = vpop.permute.xlu0 %445
      %447 = vrot.lane.b32.xlu0 %v281, 17
      %v448 = vpop.permute.xlu0 %447
      %vm449 = vcmask 138240
      %v450 = vsel %vm449, %v432, %v434
      %v451 = vsel %vm449, %v434, %v436
      %v452 = vsel %vm449, %v438, %v440
      %v453 = vsel %vm449, %v440, %v442
      %v454 = vsel %vm449, %v444, %v446
      %v455 = vsel %vm449, %v446, %v448
      %v465 = vsel %vm449, 0.0, %v432
      %v466 = vsel %vm449, 0.0, %v438
      %v467 = vsel %vm449, 0.0, %v444
      %468 = vset.pattern.permute.xlu0 2
      %469 = vperm.xlu0 %468, %v282
      %v470 = vpop.permute.xlu0 %469
      %472 = vset.pattern.permute.xlu0 2
      %473 = vperm.xlu0 %472, %v283
      %v474 = vpop.permute.xlu0 %473
      %476 = vset.pattern.permute.xlu0 2
      %477 = vperm.xlu0 %476, %v284
      %v478 = vpop.permute.xlu0 %477
      %v480 = vmul.f32 %v465, %v470
      %v481 = vmul.f32 %v450, %v470
      %v482 = vmul.f32 %v451, %v470
      %v483 = vmul.f32 %v466, %v474
      %v484 = vmul.f32 %v452, %v474
      %v485 = vmul.f32 %v453, %v474
      %v486 = vmul.f32 %v467, %v478
      %v487 = vmul.f32 %v454, %v478
      %v488 = vmul.f32 %v455, %v478
      %v489 = vadd.f32 %v422, %v480
      %v490 = vadd.f32 %v423, %v481
      %v491 = vadd.f32 %v424, %v482
      %v492 = vadd.f32 %v425, %v483
      %v493 = vadd.f32 %v426, %v484
      %v494 = vadd.f32 %v427, %v485
      %v495 = vadd.f32 %v428, %v486
      %v496 = vadd.f32 %v429, %v487
      %v497 = vadd.f32 %v430, %v488
      %498 = vrot.lane.b32.xlu0 %v273, 1
      %v499 = vpop.permute.xlu0 %498
      %500 = vrot.lane.b32.xlu0 %v274, 1
      %v501 = vpop.permute.xlu0 %500
      %502 = vrot.lane.b32.xlu0 %v275, 1
      %v503 = vpop.permute.xlu0 %502
      %504 = vrot.lane.b32.xlu0 %v276, 1
      %v505 = vpop.permute.xlu0 %504
      %506 = vrot.lane.b32.xlu0 %v277, 1
      %v507 = vpop.permute.xlu0 %506
      %508 = vrot.lane.b32.xlu0 %v278, 1
      %v509 = vpop.permute.xlu0 %508
      %510 = vrot.lane.b32.xlu0 %v279, 1
      %v511 = vpop.permute.xlu0 %510
      %512 = vrot.lane.b32.xlu0 %v280, 1
      %v513 = vpop.permute.xlu0 %512
      %514 = vrot.lane.b32.xlu0 %v281, 1
      %v515 = vpop.permute.xlu0 %514
      %vm516 = vcmask 7168
      %v517 = vsel %vm516, %v499, %v501
      %v518 = vsel %vm516, %v501, %v503
      %v519 = vsel %vm516, %v505, %v507
      %v520 = vsel %vm516, %v507, %v509
      %v521 = vsel %vm516, %v511, %v513
      %v522 = vsel %vm516, %v513, %v515
      %v532 = vsel %vm516, 0.0, %v499
      %v533 = vsel %vm516, 0.0, %v505
      %v534 = vsel %vm516, 0.0, %v511
      %535 = vset.pattern.permute.xlu0 3
      %536 = vperm.xlu0 %535, %v282
      %v537 = vpop.permute.xlu0 %536
      %539 = vset.pattern.permute.xlu0 3
      %540 = vperm.xlu0 %539, %v283
      %v541 = vpop.permute.xlu0 %540
      %543 = vset.pattern.permute.xlu0 3
      %544 = vperm.xlu0 %543, %v284
      %v545 = vpop.permute.xlu0 %544
      %v547 = vmul.f32 %v532, %v537
      %v548 = vmul.f32 %v517, %v537
      %v549 = vmul.f32 %v518, %v537
      %v550 = vmul.f32 %v533, %v541
      %v551 = vmul.f32 %v519, %v541
      %v552 = vmul.f32 %v520, %v541
      %v553 = vmul.f32 %v534, %v545
      %v554 = vmul.f32 %v521, %v545
      %v555 = vmul.f32 %v522, %v545
      %v556 = vadd.f32 %v489, %v547
      %v557 = vadd.f32 %v490, %v548
      %v558 = vadd.f32 %v491, %v549
      %v559 = vadd.f32 %v492, %v550
      %v560 = vadd.f32 %v493, %v551
      %v561 = vadd.f32 %v494, %v552
      %v562 = vadd.f32 %v495, %v553
      %v563 = vadd.f32 %v496, %v554
      %v564 = vadd.f32 %v497, %v555
      %565 = vset.pattern.permute.xlu0 4
      %566 = vperm.xlu0 %565, %v282
      %v567 = vpop.permute.xlu0 %566
      %569 = vset.pattern.permute.xlu0 4
      %570 = vperm.xlu0 %569, %v283
      %v571 = vpop.permute.xlu0 %570
      %573 = vset.pattern.permute.xlu0 4
      %574 = vperm.xlu0 %573, %v284
      %v575 = vpop.permute.xlu0 %574
      %v577 = vmul.f32 %v273, %v567
      %v578 = vmul.f32 %v274, %v567
      %v579 = vmul.f32 %v275, %v567
      %v580 = vmul.f32 %v276, %v571
      %v581 = vmul.f32 %v277, %v571
      %v582 = vmul.f32 %v278, %v571
      %v583 = vmul.f32 %v279, %v575
      %v584 = vmul.f32 %v280, %v575
      %v585 = vmul.f32 %v281, %v575
      %v586 = vadd.f32 %v556, %v577
      %v587 = vadd.f32 %v557, %v578
      %v588 = vadd.f32 %v558, %v579
      %v589 = vadd.f32 %v559, %v580
      %v590 = vadd.f32 %v560, %v581
      %v591 = vadd.f32 %v561, %v582
      %v592 = vadd.f32 %v562, %v583
      %v593 = vadd.f32 %v563, %v584
      %v594 = vadd.f32 %v564, %v585
      %595 = vrot.lane.b32.xlu0 %v273, 127
      %v596 = vpop.permute.xlu0 %595
      %597 = vrot.lane.b32.xlu0 %v274, 127
      %v598 = vpop.permute.xlu0 %597
      %599 = vrot.lane.b32.xlu0 %v275, 127
      %v600 = vpop.permute.xlu0 %599
      %601 = vrot.lane.b32.xlu0 %v276, 127
      %v602 = vpop.permute.xlu0 %601
      %603 = vrot.lane.b32.xlu0 %v277, 127
      %v604 = vpop.permute.xlu0 %603
      %605 = vrot.lane.b32.xlu0 %v278, 127
      %v606 = vpop.permute.xlu0 %605
      %607 = vrot.lane.b32.xlu0 %v279, 127
      %v608 = vpop.permute.xlu0 %607
      %609 = vrot.lane.b32.xlu0 %v280, 127
      %v610 = vpop.permute.xlu0 %609
      %611 = vrot.lane.b32.xlu0 %v281, 127
      %v612 = vpop.permute.xlu0 %611
      %vm613 = vcmask 1039360
      %v614 = vsel %vm613, %v596, %v598
      %v615 = vsel %vm613, %v598, %v600
      %v616 = vsel %vm613, %v602, %v604
      %v617 = vsel %vm613, %v604, %v606
      %v618 = vsel %vm613, %v608, %v610
      %v619 = vsel %vm613, %v610, %v612
      %v629 = vsel %vm613, %v600, 0.0
      %v630 = vsel %vm613, %v606, 0.0
      %v631 = vsel %vm613, %v612, 0.0
      %632 = vset.pattern.permute.xlu0 5
      %633 = vperm.xlu0 %632, %v282
      %v634 = vpop.permute.xlu0 %633
      %636 = vset.pattern.permute.xlu0 5
      %637 = vperm.xlu0 %636, %v283
      %v638 = vpop.permute.xlu0 %637
      %640 = vset.pattern.permute.xlu0 5
      %641 = vperm.xlu0 %640, %v284
      %v642 = vpop.permute.xlu0 %641
      %v644 = vmul.f32 %v614, %v634
      %v645 = vmul.f32 %v615, %v634
      %v646 = vmul.f32 %v629, %v634
      %v647 = vmul.f32 %v616, %v638
      %v648 = vmul.f32 %v617, %v638
      %v649 = vmul.f32 %v630, %v638
      %v650 = vmul.f32 %v618, %v642
      %v651 = vmul.f32 %v619, %v642
      %v652 = vmul.f32 %v631, %v642
      %v653 = vadd.f32 %v586, %v644
      %v654 = vadd.f32 %v587, %v645
      %v655 = vadd.f32 %v588, %v646
      %v656 = vadd.f32 %v589, %v647
      %v657 = vadd.f32 %v590, %v648
      %v658 = vadd.f32 %v591, %v649
      %v659 = vadd.f32 %v592, %v650
      %v660 = vadd.f32 %v593, %v651
      %v661 = vadd.f32 %v594, %v652
      %662 = vrot.lane.b32.xlu0 %v273, 111
      %v663 = vpop.permute.xlu0 %662
      %664 = vrot.lane.b32.xlu0 %v274, 111
      %v665 = vpop.permute.xlu0 %664
      %666 = vrot.lane.b32.xlu0 %v275, 111
      %v667 = vpop.permute.xlu0 %666
      %668 = vrot.lane.b32.xlu0 %v276, 111
      %v669 = vpop.permute.xlu0 %668
      %670 = vrot.lane.b32.xlu0 %v277, 111
      %v671 = vpop.permute.xlu0 %670
      %672 = vrot.lane.b32.xlu0 %v278, 111
      %v673 = vpop.permute.xlu0 %672
      %674 = vrot.lane.b32.xlu0 %v279, 111
      %v675 = vpop.permute.xlu0 %674
      %676 = vrot.lane.b32.xlu0 %v280, 111
      %v677 = vpop.permute.xlu0 %676
      %678 = vrot.lane.b32.xlu0 %v281, 111
      %v679 = vpop.permute.xlu0 %678
      %vm680 = vcmask 908288
      %v681 = vsel %vm680, %v663, %v665
      %v682 = vsel %vm680, %v665, %v667
      %v683 = vsel %vm680, %v669, %v671
      %v684 = vsel %vm680, %v671, %v673
      %v685 = vsel %vm680, %v675, %v677
      %v686 = vsel %vm680, %v677, %v679
      %v696 = vsel %vm680, %v667, 0.0
      %v697 = vsel %vm680, %v673, 0.0
      %v698 = vsel %vm680, %v679, 0.0
      %699 = vset.pattern.permute.xlu0 6
      %700 = vperm.xlu0 %699, %v282
      %v701 = vpop.permute.xlu0 %700
      %703 = vset.pattern.permute.xlu0 6
      %704 = vperm.xlu0 %703, %v283
      %v705 = vpop.permute.xlu0 %704
      %707 = vset.pattern.permute.xlu0 6
      %708 = vperm.xlu0 %707, %v284
      %v709 = vpop.permute.xlu0 %708
      %v711 = vmul.f32 %v681, %v701
      %v712 = vmul.f32 %v682, %v701
      %v713 = vmul.f32 %v696, %v701
      %v714 = vmul.f32 %v683, %v705
      %v715 = vmul.f32 %v684, %v705
      %v716 = vmul.f32 %v697, %v705
      %v717 = vmul.f32 %v685, %v709
      %v718 = vmul.f32 %v686, %v709
      %v719 = vmul.f32 %v698, %v709
      %v720 = vadd.f32 %v653, %v711
      %v721 = vadd.f32 %v654, %v712
      %v722 = vadd.f32 %v655, %v713
      %v723 = vadd.f32 %v656, %v714
      %v724 = vadd.f32 %v657, %v715
      %v725 = vadd.f32 %v658, %v716
      %v726 = vadd.f32 %v659, %v717
      %v727 = vadd.f32 %v660, %v718
      %v728 = vadd.f32 %v661, %v719
      %729 = vrot.lane.b32.xlu0 %v273, 110
      %v730 = vpop.permute.xlu0 %729
      %731 = vrot.lane.b32.xlu0 %v274, 110
      %v732 = vpop.permute.xlu0 %731
      %733 = vrot.lane.b32.xlu0 %v275, 110
      %v734 = vpop.permute.xlu0 %733
      %735 = vrot.lane.b32.xlu0 %v276, 110
      %v736 = vpop.permute.xlu0 %735
      %737 = vrot.lane.b32.xlu0 %v277, 110
      %v738 = vpop.permute.xlu0 %737
      %739 = vrot.lane.b32.xlu0 %v278, 110
      %v740 = vpop.permute.xlu0 %739
      %741 = vrot.lane.b32.xlu0 %v279, 110
      %v742 = vpop.permute.xlu0 %741
      %743 = vrot.lane.b32.xlu0 %v280, 110
      %v744 = vpop.permute.xlu0 %743
      %745 = vrot.lane.b32.xlu0 %v281, 110
      %v746 = vpop.permute.xlu0 %745
      %vm747 = vcmask 900096
      %v748 = vsel %vm747, %v730, %v732
      %v749 = vsel %vm747, %v732, %v734
      %v750 = vsel %vm747, %v736, %v738
      %v751 = vsel %vm747, %v738, %v740
      %v752 = vsel %vm747, %v742, %v744
      %v753 = vsel %vm747, %v744, %v746
      %v763 = vsel %vm747, %v734, 0.0
      %v764 = vsel %vm747, %v740, 0.0
      %v765 = vsel %vm747, %v746, 0.0
      %766 = vset.pattern.permute.xlu0 7
      %767 = vperm.xlu0 %766, %v282
      %v768 = vpop.permute.xlu0 %767
      %770 = vset.pattern.permute.xlu0 7
      %771 = vperm.xlu0 %770, %v283
      %v772 = vpop.permute.xlu0 %771
      %774 = vset.pattern.permute.xlu0 7
      %775 = vperm.xlu0 %774, %v284
      %v776 = vpop.permute.xlu0 %775
      %v778 = vmul.f32 %v748, %v768
      %v779 = vmul.f32 %v749, %v768
      %v780 = vmul.f32 %v763, %v768
      %v781 = vmul.f32 %v750, %v772
      %v782 = vmul.f32 %v751, %v772
      %v783 = vmul.f32 %v764, %v772
      %v784 = vmul.f32 %v752, %v776
      %v785 = vmul.f32 %v753, %v776
      %v786 = vmul.f32 %v765, %v776
      %v787 = vadd.f32 %v720, %v778
      %v788 = vadd.f32 %v721, %v779
      %v789 = vadd.f32 %v722, %v780
      %v790 = vadd.f32 %v723, %v781
      %v791 = vadd.f32 %v724, %v782
      %v792 = vadd.f32 %v725, %v783
      %v793 = vadd.f32 %v726, %v784
      %v794 = vadd.f32 %v727, %v785
      %v795 = vadd.f32 %v728, %v786
      %796 = vrot.lane.b32.xlu0 %v273, 109
      %v797 = vpop.permute.xlu0 %796
      %798 = vrot.lane.b32.xlu0 %v274, 109
      %v799 = vpop.permute.xlu0 %798
      %800 = vrot.lane.b32.xlu0 %v275, 109
      %v801 = vpop.permute.xlu0 %800
      %802 = vrot.lane.b32.xlu0 %v276, 109
      %v803 = vpop.permute.xlu0 %802
      %804 = vrot.lane.b32.xlu0 %v277, 109
      %v805 = vpop.permute.xlu0 %804
      %806 = vrot.lane.b32.xlu0 %v278, 109
      %v807 = vpop.permute.xlu0 %806
      %808 = vrot.lane.b32.xlu0 %v279, 109
      %v809 = vpop.permute.xlu0 %808
      %810 = vrot.lane.b32.xlu0 %v280, 109
      %v811 = vpop.permute.xlu0 %810
      %812 = vrot.lane.b32.xlu0 %v281, 109
      %v813 = vpop.permute.xlu0 %812
      %vm814 = vcmask 891904
      %v815 = vsel %vm814, %v797, %v799
      %v816 = vsel %vm814, %v799, %v801
      %v817 = vsel %vm814, %v803, %v805
      %v818 = vsel %vm814, %v805, %v807
      %v819 = vsel %vm814, %v809, %v811
      %v820 = vsel %vm814, %v811, %v813
      %v830 = vsel %vm814, %v801, 0.0
      %v831 = vsel %vm814, %v807, 0.0
      %v832 = vsel %vm814, %v813, 0.0
      %833 = vset.pattern.permute.xlu0 8
      %834 = vperm.xlu0 %833, %v282
      %v835 = vpop.permute.xlu0 %834
      %837 = vset.pattern.permute.xlu0 8
      %838 = vperm.xlu0 %837, %v283
      %v839 = vpop.permute.xlu0 %838
      %841 = vset.pattern.permute.xlu0 8
      %842 = vperm.xlu0 %841, %v284
      %v843 = vpop.permute.xlu0 %842
      %v845 = vmul.f32 %v815, %v835
      %v846 = vmul.f32 %v816, %v835
      %v847 = vmul.f32 %v830, %v835
      %v848 = vmul.f32 %v817, %v839
      %v849 = vmul.f32 %v818, %v839
      %v850 = vmul.f32 %v831, %v839
      %v851 = vmul.f32 %v819, %v843
      %v852 = vmul.f32 %v820, %v843
      %v853 = vmul.f32 %v832, %v843
      %v854 = vadd.f32 %v787, %v845
      %v855 = vadd.f32 %v788, %v846
      %v856 = vadd.f32 %v789, %v847
      %v857 = vadd.f32 %v790, %v848
      %v858 = vadd.f32 %v791, %v849
      %v859 = vadd.f32 %v792, %v850
      %v860 = vadd.f32 %v793, %v851
      %v861 = vadd.f32 %v794, %v852
      %v862 = vadd.f32 %v795, %v853
      %863 = vst [vmem:[%s170] sm:$0xff] %v854
      %864 = vst [vmem:[%s170 + $0x8] sm:$0xff] %v855
      %865 = vst [vmem:[%s170 + $0x10] sm:$0xff] %v856
      %866 = vst [vmem:[%s170 + $0x18] sm:$0xff] %v857
      %867 = vst [vmem:[%s170 + $0x20] sm:$0xff] %v858
      %868 = vst [vmem:[%s170 + $0x28] sm:$0xff] %v859
      %869 = vst [vmem:[%s170 + $0x30] sm:$0xf] %v860
      %870 = vst [vmem:[%s170 + $0x38] sm:$0xf] %v861
      %871 = vst [vmem:[%s170 + $0x40] sm:$0xf] %v862
      %p872 = scmp.lt.s32.totalorder %s14, 1
      %s873 = scalar_select %p872, %s14, 1
      %s874 = smul.addr %s873, 9
      %s875 = smul.addr %s874, 8
      %s876 = scalar_lea.vmem %s3, %s875
      // Predicated region
      $region33: #{dhsa_forward.3} parent=31 // pred_check
        %p877 = pneg %p100
      $region34: #{dhsa_forward.3} parent=31 // pred_check_branch
        %879 = sbr.rel (%p877) target = $region36
      $region35: #{dhsa_forward.3} parent=31 // pred_region
        _
      $region36: #{dhsa_forward.3} parent=31 // pred_fallthru
        _
    $region32: #{dhsa_forward.3} parent=5 // pred_fallthru
      _
    %p880 = scmp.le.s32.totalorder 2, %s9
    // Predicated region
    $region37: #{dhsa_forward.3} parent=5 // pred_check
      %p881 = pneg %p880
    $region38: #{dhsa_forward.3} parent=5 // pred_check_branch
      %883 = sbr.rel (%p881) target = $region40
    $region39: #{dhsa_forward.3} parent=5 // pred_region
      %s884 = ssub.s32 %s9, 2
      // Predicated region
      $region41: #{dhsa_forward.3} parent=39 // pred_check
        %p885 = pneg %p106
      $region42: #{dhsa_forward.3} parent=39 // pred_check_branch
        %887 = sbr.rel (%p885) target = $region44
      $region43: #{dhsa_forward.3} parent=39 // pred_region
        %p888 = scmp.lt.s32.totalorder %s15, 1
        %s889 = scalar_select %p888, %s15, 1
        %s890 = smul.addr %s889, 9
        %s891 = smul.addr %s890, 8
        %s892 = scalar_lea.vmem %s3, %s891
      $region44: #{dhsa_forward.3} parent=39 // pred_fallthru
        _
    $region40: #{dhsa_forward.3} parent=5 // pred_fallthru
      _
  $region6: #{dhsa_forward.3} parent=0 // loop_footer
    %s13 = sadd.s32 1, %s9
  $region7: #{dhsa_forward.3} parent=0 // loop_footer_branch
    %8 = sbr.rel target = $region3
  $region8: #{dhsa_forward.3} parent=0 // loop_exit
    _

// kernel: dhsa_forward.4
$region0: #{dhsa_forward.4}
  #allocation0 [shape = 'u32[]', space=smem, size = 0x4, offset = 0x4, fixed_abs, tag = 'smem constant byte address 0x4 - core index']
  #allocation1 [shape = 'u32[72,128]{1,0:T(1,128)}', space=vmem, size = 0x9000, scoped, tag = 'internal scratch']
  %s0 = inlined_call_operand.vmem [shape: f32[16,1], index: 0, kind: input, shape index: {}]
  %s1 = inlined_call_operand.vmem [shape: f32[16,16], index: 1, kind: input, shape index: {}]
  %s2 = inlined_call_operand.vmem [shape: f32[4,16,128], index: 2, kind: input, shape index: {}]
  %s3 = inlined_call_operand.vmem [shape: f32[4,16,128], index: 3, kind: input, shape index: {}]
  %s4 = inlined_call_operand.vmem [shape: f32[4,16,128], index: 4, kind: input, shape index: {}]
  %s5 = inlined_call_operand.vmem [shape: f32[4,16,128], index: 5, kind: output, shape index: {}]
  %s6 = sld [smem:[#allocation0]]
  $region53: #{dhsa_forward.4} parent=0
    _
  %s8 = ssub.s32 1, %s6
  %s9 = scalar_select 0, %s8, %s6
  loop: start=0, step=1, limit=6
  $region2: #{dhsa_forward.4} parent=0 // loop_pre_header
    _
  $region3: #{dhsa_forward.4} parent=0 // loop_header
    %s11 = sphi 0, %s15
    %p12 = scmp.ge.s32.totalorder %s11, 6
    %s19 = sphi 0, %s19
    %s21 = sphi 0, %s19
    %s22 = sphi 0, %s21
    %s36 = sphi 0, %s22
    %s40 = sphi 0, %s40
    %s42 = sphi 0, %s40
    %s43 = sphi 0, %s42
    %s57 = sphi 0, %s43
    %s63 = sphi 0, %s65
    %s66 = sphi 0, %s63
    %s67 = sphi 0, %s66
    %s83 = sphi 0, %s67
    %s89 = sphi 0, %s91
    %s92 = sphi 0, %s89
    %s93 = sphi 0, %s92
    %s109 = sphi 0, %s93
    %s115 = sphi 0, %s117
    %s118 = sphi 0, %s115
    %s119 = sphi 0, %s118
    %s135 = sphi 0, %s119
    %s141 = sphi 0, %s143
    %s144 = sphi 0, %s141
    %s145 = sphi 0, %s144
    %s161 = sphi 0, %s145
  $region4: #{dhsa_forward.4} parent=0 // loop_header_branch
    %14 = sbr.rel (%p12) target = $region8
  $region5: #{dhsa_forward.4} parent=0 // loop_body
    %s16 = ssub.s32 %s11, 1
    %s17 = ssub.s32 %s11, 2
    %s18 = sadd.s32 %s11, 1
    %s20 = sadd.s32 %s19, 1
    %p23 = scmp.eq.s32.totalorder %s11, 3
    %p24 = scmp.ne.s32.totalorder %s19, %s21
    %p25 = scmp.eq.s32.totalorder %s11, 0
    %p26 = por %p24, %p25
    %p27 = scmp.ne.s32.totalorder %s19, %s21
    %p28 = scmp.eq.s32.totalorder %s16, 3
    %p29 = por %p27, %p28
    %p30 = scmp.ne.s32.totalorder %s21, %s22
    %p31 = scmp.eq.s32.totalorder %s16, 0
    %p32 = por %p30, %p31
    %p33 = scmp.ne.s32.totalorder %s21, %s22
    %p34 = scmp.eq.s32.totalorder %s17, 3
    %p35 = por %p33, %p34
    %p37 = scmp.ne.s32.totalorder %s22, %s36
    %p38 = scmp.eq.s32.totalorder %s17, 0
    %p39 = por %p37, %p38
    %s41 = sadd.s32 %s40, 1
    %p44 = scmp.eq.s32.totalorder %s11, 3
    %p45 = scmp.ne.s32.totalorder %s40, %s42
    %p46 = scmp.eq.s32.totalorder %s11, 0
    %p47 = por %p45, %p46
    %p48 = scmp.ne.s32.totalorder %s40, %s42
    %p49 = scmp.eq.s32.totalorder %s16, 3
    %p50 = por %p48, %p49
    %p51 = scmp.ne.s32.totalorder %s42, %s43
    %p52 = scmp.eq.s32.totalorder %s16, 0
    %p53 = por %p51, %p52
    %p54 = scmp.ne.s32.totalorder %s42, %s43
    %p55 = scmp.eq.s32.totalorder %s17, 3
    %p56 = por %p54, %p55
    %p58 = scmp.ne.s32.totalorder %s43, %s57
    %p59 = scmp.eq.s32.totalorder %s17, 0
    %p60 = por %p58, %p59
    %s61 = ssub.s32 %s11, %s18
    %p62 = scmp.eq.s32.totalorder %s61, 0
    %s64 = sadd.s32 %s63, 1
    %s65 = scalar_select %p62, %s63, %s64
    %p68 = pneg %p62
    %p69 = scmp.eq.s32.totalorder %s11, 3
    %p70 = por %p68, %p69
    %p71 = scmp.ne.s32.totalorder %s63, %s66
    %p72 = scmp.eq.s32.totalorder %s11, 0
    %p73 = por %p71, %p72
    %p74 = scmp.ne.s32.totalorder %s63, %s66
    %p75 = scmp.eq.s32.totalorder %s16, 3
    %p76 = por %p74, %p75
    %p77 = scmp.ne.s32.totalorder %s66, %s67
    %p78 = scmp.eq.s32.totalorder %s16, 0
    %p79 = por %p77, %p78
    %p80 = scmp.ne.s32.totalorder %s66, %s67
    %p81 = scmp.eq.s32.totalorder %s17, 3
    %p82 = por %p80, %p81
    %p84 = scmp.ne.s32.totalorder %s67, %s83
    %p85 = scmp.eq.s32.totalorder %s17, 0
    %p86 = por %p84, %p85
    %s87 = ssub.s32 %s11, %s18
    %p88 = scmp.eq.s32.totalorder %s87, 0
    %s90 = sadd.s32 %s89, 1
    %s91 = scalar_select %p88, %s89, %s90
    %p94 = pneg %p88
    %p95 = scmp.eq.s32.totalorder %s11, 3
    %p96 = por %p94, %p95
    %p97 = scmp.ne.s32.totalorder %s89, %s92
    %p98 = scmp.eq.s32.totalorder %s11, 0
    %p99 = por %p97, %p98
    %p100 = scmp.ne.s32.totalorder %s89, %s92
    %p101 = scmp.eq.s32.totalorder %s16, 3
    %p102 = por %p100, %p101
    %p103 = scmp.ne.s32.totalorder %s92, %s93
    %p104 = scmp.eq.s32.totalorder %s16, 0
    %p105 = por %p103, %p104
    %p106 = scmp.ne.s32.totalorder %s92, %s93
    %p107 = scmp.eq.s32.totalorder %s17, 3
    %p108 = por %p106, %p107
    %p110 = scmp.ne.s32.totalorder %s93, %s109
    %p111 = scmp.eq.s32.totalorder %s17, 0
    %p112 = por %p110, %p111
    %s113 = ssub.s32 %s11, %s18
    %p114 = scmp.eq.s32.totalorder %s113, 0
    %s116 = sadd.s32 %s115, 1
    %s117 = scalar_select %p114, %s115, %s116
    %p120 = pneg %p114
    %p121 = scmp.eq.s32.totalorder %s11, 3
    %p122 = por %p120, %p121
    %p123 = scmp.ne.s32.totalorder %s115, %s118
    %p124 = scmp.eq.s32.totalorder %s11, 0
    %p125 = por %p123, %p124
    %p126 = scmp.ne.s32.totalorder %s115, %s118
    %p127 = scmp.eq.s32.totalorder %s16, 3
    %p128 = por %p126, %p127
    %p129 = scmp.ne.s32.totalorder %s118, %s119
    %p130 = scmp.eq.s32.totalorder %s16, 0
    %p131 = por %p129, %p130
    %p132 = scmp.ne.s32.totalorder %s118, %s119
    %p133 = scmp.eq.s32.totalorder %s17, 3
    %p134 = por %p132, %p133
    %p136 = scmp.ne.s32.totalorder %s119, %s135
    %p137 = scmp.eq.s32.totalorder %s17, 0
    %p138 = por %p136, %p137
    %s139 = ssub.s32 %s11, %s18
    %p140 = scmp.eq.s32.totalorder %s139, 0
    %s142 = sadd.s32 %s141, 1
    %s143 = scalar_select %p140, %s141, %s142
    %p146 = pneg %p140
    %p147 = scmp.eq.s32.totalorder %s11, 3
    %p148 = por %p146, %p147
    %p149 = scmp.ne.s32.totalorder %s141, %s144
    %p150 = scmp.eq.s32.totalorder %s11, 0
    %p151 = por %p149, %p150
    %p152 = scmp.ne.s32.totalorder %s141, %s144
    %p153 = scmp.eq.s32.totalorder %s16, 3
    %p154 = por %p152, %p153
    %p155 = scmp.ne.s32.totalorder %s144, %s145
    %p156 = scmp.eq.s32.totalorder %s16, 0
    %p157 = por %p155, %p156
    %p158 = scmp.ne.s32.totalorder %s144, %s145
    %p159 = scmp.eq.s32.totalorder %s17, 3
    %p160 = por %p158, %p159
    %p162 = scmp.ne.s32.totalorder %s145, %s161
    %p163 = scmp.eq.s32.totalorder %s17, 0
    %p164 = por %p162, %p163
    %p165 = scmp.le.s32.totalorder 1, %s11
    %p166 = scmp.lt.s32.totalorder %s11, 5
    %p167 = pnand %p165, %p166
    %p168 = pneg %p167
    // Predicated region
    $region9: #{dhsa_forward.4} parent=5 // pred_check
      _
    $region10: #{dhsa_forward.4} parent=5 // pred_check_branch
      %170 = sbr.rel (%p167) target = $region12
    $region11: #{dhsa_forward.4} parent=5 // pred_region
      %s171 = ssub.s32 %s11, 1
      // Predicated region
      $region13: #{dhsa_forward.4} parent=11 // pred_check
        %p172 = pneg %p32
      $region14: #{dhsa_forward.4} parent=11 // pred_check_branch
        %174 = sbr.rel (%p172) target = $region16
      $region15: #{dhsa_forward.4} parent=11 // pred_region
        _
      $region16: #{dhsa_forward.4} parent=11 // pred_fallthru
        _
      // Predicated region
      $region17: #{dhsa_forward.4} parent=11 // pred_check
        %p175 = pneg %p53
      $region18: #{dhsa_forward.4} parent=11 // pred_check_branch
        %177 = sbr.rel (%p175) target = $region20
      $region19: #{dhsa_forward.4} parent=11 // pred_region
        _
      $region20: #{dhsa_forward.4} parent=11 // pred_fallthru
        _
    $region12: #{dhsa_forward.4} parent=5 // pred_fallthru
      _
    %p178 = scmp.lt.s32.totalorder %s11, 4
    // Predicated region
    $region21: #{dhsa_forward.4} parent=5 // pred_check
      %p179 = pneg %p178
    $region22: #{dhsa_forward.4} parent=5 // pred_check_branch
      %181 = sbr.rel (%p179) target = $region24
    $region23: #{dhsa_forward.4} parent=5 // pred_region
      // Predicated region
      $region25: #{dhsa_forward.4} parent=23 // pred_check
        %p182 = pneg %p73
      $region26: #{dhsa_forward.4} parent=23 // pred_check_branch
        %184 = sbr.rel (%p182) target = $region28
      $region27: #{dhsa_forward.4} parent=23 // pred_region
        %p185 = scmp.lt.s32.totalorder %s11, 3
        %s186 = scalar_select %p185, %s11, 3
        %s187 = smul.addr %s186, 2
        %s188 = smul.addr %s187, 8
        %s189 = scalar_lea.vmem %s2, %s188
      $region28: #{dhsa_forward.4} parent=23 // pred_fallthru
        _
      // Predicated region
      $region29: #{dhsa_forward.4} parent=23 // pred_check
        %p190 = pneg %p99
      $region30: #{dhsa_forward.4} parent=23 // pred_check_branch
        %192 = sbr.rel (%p190) target = $region32
      $region31: #{dhsa_forward.4} parent=23 // pred_region
        %p193 = scmp.lt.s32.totalorder %s11, 3
        %s194 = scalar_select %p193, %s11, 3
        %s195 = smul.addr %s194, 2
        %s196 = smul.addr %s195, 8
        %s197 = scalar_lea.vmem %s3, %s196
      $region32: #{dhsa_forward.4} parent=23 // pred_fallthru
        _
      // Predicated region
      $region33: #{dhsa_forward.4} parent=23 // pred_check
        %p198 = pneg %p125
      $region34: #{dhsa_forward.4} parent=23 // pred_check_branch
        %200 = sbr.rel (%p198) target = $region36
      $region35: #{dhsa_forward.4} parent=23 // pred_region
        %p201 = scmp.lt.s32.totalorder %s11, 3
        %s202 = scalar_select %p201, %s11, 3
        %s203 = smul.addr %s202, 2
        %s204 = smul.addr %s203, 8
        %s205 = scalar_lea.vmem %s4, %s204
      $region36: #{dhsa_forward.4} parent=23 // pred_fallthru
        _
    $region24: #{dhsa_forward.4} parent=5 // pred_fallthru
      _
    %p206 = scmp.le.s32.totalorder 1, %s11
    %p207 = scmp.lt.s32.totalorder %s11, 5
    %p208 = pnand %p206, %p207
    %p209 = pneg %p208
    // Predicated region
    $region37: #{dhsa_forward.4} parent=5 // pred_check
      _
    $region38: #{dhsa_forward.4} parent=5 // pred_check_branch
      %211 = sbr.rel (%p208) target = $region40
    $region39: #{dhsa_forward.4} parent=5 // pred_region
      %s212 = ssub.s32 %s11, 1
      %p213 = pneg %p32
      %p214 = pneg %p29
      %p215 = pneg %p53
      %p216 = pneg %p50
      %p217 = scmp.lt.s32.totalorder %s16, 3
      %s218 = scalar_select %p217, %s16, 3
      %s219 = smul.addr %s218, 2
      %s220 = smul.addr %s219, 8
      %s221 = scalar_lea.vmem %s2, %s220
      %p222 = pneg %p79
      %p223 = pneg %p76
      %p224 = scmp.lt.s32.totalorder %s16, 3
      %s225 = scalar_select %p224, %s16, 3
      %s226 = smul.addr %s225, 2
      %s227 = smul.addr %s226, 8
      %s228 = scalar_lea.vmem %s3, %s227
      %p229 = pneg %p105
      %p230 = pneg %p102
      %p231 = scmp.lt.s32.totalorder %s16, 3
      %s232 = scalar_select %p231, %s16, 3
      %s233 = smul.addr %s232, 2
      %s234 = smul.addr %s233, 8
      %s235 = scalar_lea.vmem %s4, %s234
      %p236 = pneg %p131
      %p237 = pneg %p128
      %p238 = pneg %p157
      %p239 = pneg %p154
      %p240 = scmp.lt.s32.totalorder %s16, 3
      %s241 = scalar_select %p240, %s16, 3
      %s242 = smul.addr %s241, 2
      %s243 = smul.addr %s242, 8
      %s244 = scalar_lea.vmem %s5, %s243
      %p245 = scmp.lt.s32.totalorder %s16, 3
      %s246 = scalar_select %p245, %s16, 3
      %s247 = smul.addr %s246, 2
      %s248 = smul.addr %s247, 8
      %s249 = scalar_lea.vmem %s2, %s248
      %p250 = scmp.lt.s32.totalorder %s16, 3
      %s251 = scalar_select %p250, %s16, 3
      %s252 = smul.addr %s251, 2
      %s253 = smul.addr %s252, 8
      %s254 = scalar_lea.vmem %s3, %s253
      %p255 = scmp.lt.s32.totalorder %s16, 3
      %s256 = scalar_select %p255, %s16, 3
      %s257 = smul.addr %s256, 2
      %s258 = smul.addr %s257, 8
      %s259 = scalar_lea.vmem %s4, %s258
      %p260 = scmp.lt.s32.totalorder %s16, 3
      %s261 = scalar_select %p260, %s16, 3
      %s262 = smul.addr %s261, 2
      %s263 = smul.addr %s262, 8
      %s264 = scalar_lea.vmem %s5, %s263
      %v266 = vld [vmem:[%s249] sm:$0xff]
      %v267 = vld [vmem:[%s249 + $0x8] sm:$0xff]
      %v268 = vld [vmem:[%s254] sm:$0xff]
      %v269 = vld [vmem:[%s254 + $0x8] sm:$0xff]
      %v270 = vld [vmem:[%s259] sm:$0xff]
      %v271 = vld [vmem:[%s259 + $0x8] sm:$0xff]
      %v272 = vmul.f32 %v266, %v266
      %v273 = vmul.f32 %v267, %v267
      %274 = vadd.xlane.f32.xlu0 %v272
      %v275 = vpop.xlane.xlu0 %274
      %276 = vadd.xlane.f32.xlu0 %v273
      %v277 = vpop.xlane.xlu0 %276
      %v278 = vmax.f32 %v275, 1e-24
      %v279 = vmax.f32 %v277, 1e-24
      %v280 = vrsqrt.pop %v278
      %v281 = vmul.f32 %v280, %v278
      %v282 = vmul.f32 %v281, %v280
      %v283 = vmul.f32 0.5, %v282
      %v284 = vsub.f32 1.5, %v283
      %v285 = vmul.f32 %v280, %v284
      %vm286 = vweird.f32 %v278
      %vm287 = vweird.f32 %v280
      %vm288 = vmor %vm286, %vm287
      %v289 = vsel %vm288, %v280, %v285
      %v290 = vrsqrt.pop %v279
      %v291 = vmul.f32 %v290, %v279
      %v292 = vmul.f32 %v291, %v290
      %v293 = vmul.f32 0.5, %v292
      %v294 = vsub.f32 1.5, %v293
      %v295 = vmul.f32 %v290, %v294
      %vm296 = vweird.f32 %v279
      %vm297 = vweird.f32 %v290
      %vm298 = vmor %vm296, %vm297
      %v299 = vsel %vm298, %v290, %v295
      %v300 = vmul.f32 %v268, %v268
      %v301 = vmul.f32 %v269, %v269
      %302 = vadd.xlane.f32.xlu0 %v300
      %v303 = vpop.xlane.xlu0 %302
      %304 = vadd.xlane.f32.xlu0 %v301
      %v305 = vpop.xlane.xlu0 %304
      %v306 = vmax.f32 %v303, 1e-24
      %v307 = vmax.f32 %v305, 1e-24
      %v308 = vrsqrt.pop %v306
      %v309 = vmul.f32 %v308, %v306
      %v310 = vmul.f32 %v309, %v308
      %v311 = vmul.f32 0.5, %v310
      %v312 = vsub.f32 1.5, %v311
      %v313 = vmul.f32 %v308, %v312
      %vm314 = vweird.f32 %v306
      %vm315 = vweird.f32 %v308
      %vm316 = vmor %vm314, %vm315
      %v317 = vsel %vm316, %v308, %v313
      %v318 = vrsqrt.pop %v307
      %v319 = vmul.f32 %v318, %v307
      %v320 = vmul.f32 %v319, %v318
      %v321 = vmul.f32 0.5, %v320
      %v322 = vsub.f32 1.5, %v321
      %v323 = vmul.f32 %v318, %v322
      %vm324 = vweird.f32 %v307
      %vm325 = vweird.f32 %v318
      %vm326 = vmor %vm324, %vm325
      %v327 = vsel %vm326, %v318, %v323
      %v328 = vmul.f32 %v266, %v289
      %v329 = vmul.f32 %v267, %v299
      %v330 = vpack.c.bf16 %v329, %v328
      %v331 = vmul.f32 %v268, %v317
      %v332 = vmul.f32 %v269, %v327
      %v333 = vpack.c.bf16 %v332, %v331
      %334 = vmatpush.bf16.xpose.msra.mxu0 0
      %335 = vmatpush.bf16.xpose.msra.mxu0 0
      %336 = vmatpush.bf16.xpose.msra.mxu0 0
      %337 = vmatpush.bf16.xpose.msra.mxu0 0
      %338 = vmatpush.bf16.xpose.msra.mxu0 0
      %339 = vmatpush.bf16.xpose.msra.mxu0 0
      %340 = vmatpush.bf16.xpose.msra.mxu0 0
      %341 = vmatpush.bf16.xpose.msra.mxu0 %v333
      %342 = vmatmul.bf16.gmra.mxu0 %v330
      %v343 = vpop.f32.mrf.mxu0
      %v344 = vadd.f32 0.0, %v343
      %v345 = vpop.f32.mrf.mxu0
      %v346 = vadd.f32 0.0, %v345
      %347 = vdwg.mxu0
      %v348 = vld [vmem:[%s0] sm:$0xff]
      %v349 = vld [vmem:[%s0 + $0x8] sm:$0xff]
      %351 = vset.pattern.permute.xlu0 0
      %352 = vperm.xlu0 %351, %v348
      %v353 = vpop.permute.xlu0 %352
      %356 = vset.pattern.permute.xlu0 0
      %357 = vperm.xlu0 %356, %v349
      %v358 = vpop.permute.xlu0 %357
      %v360 = vmul.f32 %v344, %v353
      %v361 = vmul.f32 %v346, %v358
      %v362 = vmul.f32 %v360, 1.442695
      %v363 = vpow.pop %v362
      %v364 = vmul.f32 %v361, 1.442695
      %v365 = vpow.pop %v364
      %v366 = vld [vmem:[%s1] sm:$0xff]
      %v367 = vld [vmem:[%s1 + $0x8] sm:$0xff]
      %v368 = vmul.f32 %v363, %v366
      %v369 = vmul.f32 %v365, %v367
      %vm370 = vcmask 130048
      %v371 = vsel %vm370, %v368, 0.0
      %372 = vadd.xlane.f32.xlu0 %v371
      %v373 = vpop.xlane.xlu0 %372
      %v374 = vsel %vm370, %v369, 0.0
      %375 = vadd.xlane.f32.xlu0 %v374
      %v376 = vpop.xlane.xlu0 %375
      %v377 = vadd.f32 %v373, 1.0
      %v378 = vadd.f32 %v376, 1.0
      %v379 = vrcp.pop %v377
      %v380 = vrcp.pop %v378
      %v381 = vmul.f32 %v368, %v379
      %v382 = vmul.f32 %v369, %v380
      %v383 = vpack.c.bf16 %v382, %v381
      %v384 = vpack.c.bf16 %v271, %v270
      %v386 = vsel %vm370, %v383, 0
      %388 = vmatpush.bf16.msra.mxu0 0
      %389 = vmatpush.bf16.msra.mxu0 0
      %390 = vmatpush.bf16.msra.mxu0 0
      %391 = vmatpush.bf16.msra.mxu0 0
      %392 = vmatpush.bf16.msra.mxu0 0
      %393 = vmatpush.bf16.msra.mxu0 0
      %394 = vmatpush.bf16.msra.mxu0 0
      %395 = vmatpush.bf16.msra.mxu0 %v384
      %396 = vmatmul.bf16.gmra.mxu0 %v386
      %v397 = vpop.f32.mrf.mxu0
      %v398 = vadd.f32 0.0, %v397
      %v399 = vpop.f32.mrf.mxu0
      %v400 = vadd.f32 0.0, %v399
      %401 = vdwg.mxu0
      %402 = vst [vmem:[%s264] sm:$0xff] %v398
      %403 = vst [vmem:[%s264 + $0x8] sm:$0xff] %v400
      %p404 = scmp.lt.s32.totalorder %s16, 3
      %s405 = scalar_select %p404, %s16, 3
      %s406 = smul.addr %s405, 2
      %s407 = smul.addr %s406, 8
      %s408 = scalar_lea.vmem %s5, %s407
      // Predicated region
      $region41: #{dhsa_forward.4} parent=39 // pred_check
        %p409 = pneg %p154
      $region42: #{dhsa_forward.4} parent=39 // pred_check_branch
        %411 = sbr.rel (%p409) target = $region44
      $region43: #{dhsa_forward.4} parent=39 // pred_region
        _
      $region44: #{dhsa_forward.4} parent=39 // pred_fallthru
        _
    $region40: #{dhsa_forward.4} parent=5 // pred_fallthru
      _
    %p412 = scmp.le.s32.totalorder 2, %s11
    // Predicated region
    $region45: #{dhsa_forward.4} parent=5 // pred_check
      %p413 = pneg %p412
    $region46: #{dhsa_forward.4} parent=5 // pred_check_branch
      %415 = sbr.rel (%p413) target = $region48
    $region47: #{dhsa_forward.4} parent=5 // pred_region
      %s416 = ssub.s32 %s11, 2
      // Predicated region
      $region49: #{dhsa_forward.4} parent=47 // pred_check
        %p417 = pneg %p160
      $region50: #{dhsa_forward.4} parent=47 // pred_check_branch
        %419 = sbr.rel (%p417) target = $region52
      $region51: #{dhsa_forward.4} parent=47 // pred_region
        %p420 = scmp.lt.s32.totalorder %s17, 3
        %s421 = scalar_select %p420, %s17, 3
        %s422 = smul.addr %s421, 2
        %s423 = smul.addr %s422, 8
        %s424 = scalar_lea.vmem %s5, %s423
      $region52: #{dhsa_forward.4} parent=47 // pred_fallthru
        _
    $region48: #{dhsa_forward.4} parent=5 // pred_fallthru
      _
  $region6: #{dhsa_forward.4} parent=0 // loop_footer
    %s15 = sadd.s32 1, %s11
  $region7: #{dhsa_forward.4} parent=0 // loop_footer_branch
    %10 = sbr.rel target = $region3
  $region8: #{dhsa_forward.4} parent=0 // loop_exit
    _

// kernel: dhsa_forward.5
$region0: #{dhsa_forward.5}
  #allocation0 [shape = 'u32[]', space=smem, size = 0x4, offset = 0x4, fixed_abs, tag = 'smem constant byte address 0x4 - core index']
  #allocation1 [shape = 'u32[72,128]{1,0:T(1,128)}', space=vmem, size = 0x9000, scoped, tag = 'internal scratch']
  %s0 = inlined_call_operand.vmem [shape: f32[2,4,256], index: 0, kind: input, shape index: {}]
  %s1 = inlined_call_operand.vmem [shape: f32[2,4,256], index: 1, kind: input, shape index: {}]
  %s2 = inlined_call_operand.vmem [shape: f32[4,4], index: 2, kind: input, shape index: {}]
  %s3 = inlined_call_operand.vmem [shape: f32[2,4,256], index: 3, kind: output, shape index: {}]
  %s4 = sld [smem:[#allocation0]]
  $region45: #{dhsa_forward.5} parent=0
    _
  %s6 = ssub.s32 1, %s4
  %s7 = scalar_select 0, %s6, %s4
  loop: start=0, step=1, limit=4
  $region2: #{dhsa_forward.5} parent=0 // loop_pre_header
    _
  $region3: #{dhsa_forward.5} parent=0 // loop_header
    %s9 = sphi 0, %s13
    %p10 = scmp.ge.s32.totalorder %s9, 4
    %s19 = sphi 0, %s21
    %s22 = sphi 0, %s19
    %s23 = sphi 0, %s22
    %s39 = sphi 0, %s23
    %s45 = sphi 0, %s47
    %s48 = sphi 0, %s45
    %s49 = sphi 0, %s48
    %s65 = sphi 0, %s49
    %s69 = sphi 0, %s69
    %s71 = sphi 0, %s69
    %s72 = sphi 0, %s71
    %s86 = sphi 0, %s72
    %s92 = sphi 0, %s94
    %s95 = sphi 0, %s92
    %s96 = sphi 0, %s95
    %s112 = sphi 0, %s96
  $region4: #{dhsa_forward.5} parent=0 // loop_header_branch
    %12 = sbr.rel (%p10) target = $region8
  $region5: #{dhsa_forward.5} parent=0 // loop_body
    %s14 = ssub.s32 %s9, 1
    %s15 = ssub.s32 %s9, 2
    %s16 = sadd.s32 %s9, 1
    %s17 = ssub.s32 %s9, %s16
    %p18 = scmp.eq.s32.totalorder %s17, 0
    %s20 = sadd.s32 %s19, 1
    %s21 = scalar_select %p18, %s19, %s20
    %p24 = pneg %p18
    %p25 = scmp.eq.s32.totalorder %s9, 1
    %p26 = por %p24, %p25
    %p27 = scmp.ne.s32.totalorder %s19, %s22
    %p28 = scmp.eq.s32.totalorder %s9, 0
    %p29 = por %p27, %p28
    %p30 = scmp.ne.s32.totalorder %s19, %s22
    %p31 = scmp.eq.s32.totalorder %s14, 1
    %p32 = por %p30, %p31
    %p33 = scmp.ne.s32.totalorder %s22, %s23
    %p34 = scmp.eq.s32.totalorder %s14, 0
    %p35 = por %p33, %p34
    %p36 = scmp.ne.s32.totalorder %s22, %s23
    %p37 = scmp.eq.s32.totalorder %s15, 1
    %p38 = por %p36, %p37
    %p40 = scmp.ne.s32.totalorder %s23, %s39
    %p41 = scmp.eq.s32.totalorder %s15, 0
    %p42 = por %p40, %p41
    %s43 = ssub.s32 %s9, %s16
    %p44 = scmp.eq.s32.totalorder %s43, 0
    %s46 = sadd.s32 %s45, 1
    %s47 = scalar_select %p44, %s45, %s46
    %p50 = pneg %p44
    %p51 = scmp.eq.s32.totalorder %s9, 1
    %p52 = por %p50, %p51
    %p53 = scmp.ne.s32.totalorder %s45, %s48
    %p54 = scmp.eq.s32.totalorder %s9, 0
    %p55 = por %p53, %p54
    %p56 = scmp.ne.s32.totalorder %s45, %s48
    %p57 = scmp.eq.s32.totalorder %s14, 1
    %p58 = por %p56, %p57
    %p59 = scmp.ne.s32.totalorder %s48, %s49
    %p60 = scmp.eq.s32.totalorder %s14, 0
    %p61 = por %p59, %p60
    %p62 = scmp.ne.s32.totalorder %s48, %s49
    %p63 = scmp.eq.s32.totalorder %s15, 1
    %p64 = por %p62, %p63
    %p66 = scmp.ne.s32.totalorder %s49, %s65
    %p67 = scmp.eq.s32.totalorder %s15, 0
    %p68 = por %p66, %p67
    %s70 = sadd.s32 %s69, 1
    %p73 = scmp.eq.s32.totalorder %s9, 1
    %p74 = scmp.ne.s32.totalorder %s69, %s71
    %p75 = scmp.eq.s32.totalorder %s9, 0
    %p76 = por %p74, %p75
    %p77 = scmp.ne.s32.totalorder %s69, %s71
    %p78 = scmp.eq.s32.totalorder %s14, 1
    %p79 = por %p77, %p78
    %p80 = scmp.ne.s32.totalorder %s71, %s72
    %p81 = scmp.eq.s32.totalorder %s14, 0
    %p82 = por %p80, %p81
    %p83 = scmp.ne.s32.totalorder %s71, %s72
    %p84 = scmp.eq.s32.totalorder %s15, 1
    %p85 = por %p83, %p84
    %p87 = scmp.ne.s32.totalorder %s72, %s86
    %p88 = scmp.eq.s32.totalorder %s15, 0
    %p89 = por %p87, %p88
    %s90 = ssub.s32 %s9, %s16
    %p91 = scmp.eq.s32.totalorder %s90, 0
    %s93 = sadd.s32 %s92, 1
    %s94 = scalar_select %p91, %s92, %s93
    %p97 = pneg %p91
    %p98 = scmp.eq.s32.totalorder %s9, 1
    %p99 = por %p97, %p98
    %p100 = scmp.ne.s32.totalorder %s92, %s95
    %p101 = scmp.eq.s32.totalorder %s9, 0
    %p102 = por %p100, %p101
    %p103 = scmp.ne.s32.totalorder %s92, %s95
    %p104 = scmp.eq.s32.totalorder %s14, 1
    %p105 = por %p103, %p104
    %p106 = scmp.ne.s32.totalorder %s95, %s96
    %p107 = scmp.eq.s32.totalorder %s14, 0
    %p108 = por %p106, %p107
    %p109 = scmp.ne.s32.totalorder %s95, %s96
    %p110 = scmp.eq.s32.totalorder %s15, 1
    %p111 = por %p109, %p110
    %p113 = scmp.ne.s32.totalorder %s96, %s112
    %p114 = scmp.eq.s32.totalorder %s15, 0
    %p115 = por %p113, %p114
    %p116 = scmp.le.s32.totalorder 1, %s9
    %p117 = scmp.lt.s32.totalorder %s9, 3
    %p118 = pnand %p116, %p117
    %p119 = pneg %p118
    // Predicated region
    $region9: #{dhsa_forward.5} parent=5 // pred_check
      _
    $region10: #{dhsa_forward.5} parent=5 // pred_check_branch
      %121 = sbr.rel (%p118) target = $region12
    $region11: #{dhsa_forward.5} parent=5 // pred_region
      %s122 = ssub.s32 %s9, 1
      // Predicated region
      $region13: #{dhsa_forward.5} parent=11 // pred_check
        %p123 = pneg %p82
      $region14: #{dhsa_forward.5} parent=11 // pred_check_branch
        %125 = sbr.rel (%p123) target = $region16
      $region15: #{dhsa_forward.5} parent=11 // pred_region
        _
      $region16: #{dhsa_forward.5} parent=11 // pred_fallthru
        _
    $region12: #{dhsa_forward.5} parent=5 // pred_fallthru
      _
    %p126 = scmp.lt.s32.totalorder %s9, 2
    // Predicated region
    $region17: #{dhsa_forward.5} parent=5 // pred_check
      %p127 = pneg %p126
    $region18: #{dhsa_forward.5} parent=5 // pred_check_branch
      %129 = sbr.rel (%p127) target = $region20
    $region19: #{dhsa_forward.5} parent=5 // pred_region
      // Predicated region
      $region21: #{dhsa_forward.5} parent=19 // pred_check
        %p130 = pneg %p29
      $region22: #{dhsa_forward.5} parent=19 // pred_check_branch
        %132 = sbr.rel (%p130) target = $region24
      $region23: #{dhsa_forward.5} parent=19 // pred_region
        %p133 = scmp.lt.s32.totalorder %s9, 1
        %s134 = scalar_select %p133, %s9, 1
        %s135 = smul.addr %s134, 2
        %s136 = smul.addr %s135, 4
        %s137 = scalar_lea.vmem %s0, %s136
      $region24: #{dhsa_forward.5} parent=19 // pred_fallthru
        _
      // Predicated region
      $region25: #{dhsa_forward.5} parent=19 // pred_check
        %p138 = pneg %p55
      $region26: #{dhsa_forward.5} parent=19 // pred_check_branch
        %140 = sbr.rel (%p138) target = $region28
      $region27: #{dhsa_forward.5} parent=19 // pred_region
        %p141 = scmp.lt.s32.totalorder %s9, 1
        %s142 = scalar_select %p141, %s9, 1
        %s143 = smul.addr %s142, 2
        %s144 = smul.addr %s143, 4
        %s145 = scalar_lea.vmem %s1, %s144
      $region28: #{dhsa_forward.5} parent=19 // pred_fallthru
        _
    $region20: #{dhsa_forward.5} parent=5 // pred_fallthru
      _
    %p146 = scmp.le.s32.totalorder 1, %s9
    %p147 = scmp.lt.s32.totalorder %s9, 3
    %p148 = pnand %p146, %p147
    %p149 = pneg %p148
    // Predicated region
    $region29: #{dhsa_forward.5} parent=5 // pred_check
      _
    $region30: #{dhsa_forward.5} parent=5 // pred_check_branch
      %151 = sbr.rel (%p148) target = $region32
    $region31: #{dhsa_forward.5} parent=5 // pred_region
      %s152 = ssub.s32 %s9, 1
      %p153 = scmp.lt.s32.totalorder %s14, 1
      %s154 = scalar_select %p153, %s14, 1
      %s155 = smul.addr %s154, 2
      %s156 = smul.addr %s155, 4
      %s157 = scalar_lea.vmem %s0, %s156
      %p158 = pneg %p35
      %p159 = pneg %p32
      %p160 = scmp.lt.s32.totalorder %s14, 1
      %s161 = scalar_select %p160, %s14, 1
      %s162 = smul.addr %s161, 2
      %s163 = smul.addr %s162, 4
      %s164 = scalar_lea.vmem %s1, %s163
      %p165 = pneg %p61
      %p166 = pneg %p58
      %p167 = pneg %p82
      %p168 = pneg %p79
      %p169 = pneg %p108
      %p170 = pneg %p105
      %p171 = scmp.lt.s32.totalorder %s14, 1
      %s172 = scalar_select %p171, %s14, 1
      %s173 = smul.addr %s172, 2
      %s174 = smul.addr %s173, 4
      %s175 = scalar_lea.vmem %s3, %s174
      %p176 = scmp.lt.s32.totalorder %s14, 1
      %s177 = scalar_select %p176, %s14, 1
      %s178 = smul.addr %s177, 2
      %s179 = smul.addr %s178, 4
      %s180 = scalar_lea.vmem %s0, %s179
      %p181 = scmp.lt.s32.totalorder %s14, 1
      %s182 = scalar_select %p181, %s14, 1
      %s183 = smul.addr %s182, 2
      %s184 = smul.addr %s183, 4
      %s185 = scalar_lea.vmem %s1, %s184
      %p186 = scmp.lt.s32.totalorder %s14, 1
      %s187 = scalar_select %p186, %s14, 1
      %s188 = smul.addr %s187, 2
      %s189 = smul.addr %s188, 4
      %s190 = scalar_lea.vmem %s3, %s189
      %v192 = vld [vmem:[%s180] sm:$0xff]
      %v193 = vld [vmem:[%s185] sm:$0xff]
      %v194 = vmul.f32 %v192, %v193
      %196 = vst [vmem:[#allocation1] ss:$2 sm:$0xff] %v194
      %v197 = vld.sshfl [vmem:[#allocation1] sm:$0xff pattern:$0x75316420]
      %v198 = vld.sshfl [vmem:[#allocation1 + $0x8] sm:$0xff pattern:$0x75316420]
      %v201 = vpack.c.bf16 %v197, %v197
      %v202 = vpack.c.bf16 %v198, %v198
      %v203 = vld [vmem:[%s2] sm:$0xf]
      %v204 = vpack.c.bf16 %v203, %v203
      %vm205 = vcmask 31744
      %v207 = vsel %vm205, %v204, 0
      %vm209 = vcmask 1041408
      %v211 = vsel %vm209, %v201, 0
      %v214 = vsel %vm209, %v202, 0
      %216 = vmatpush.bf16.msra.mxu0 0
      %217 = vmatpush.bf16.msra.mxu0 0
      %218 = vmatpush.bf16.msra.mxu0 0
      %219 = vmatpush.bf16.msra.mxu0 0
      %220 = vmatpush.bf16.msra.mxu0 0
      %221 = vmatpush.bf16.msra.mxu0 0
      %222 = vmatpush.bf16.msra.mxu0 0
      %223 = vmatpush.bf16.msra.mxu0 %v211
      %224 = vmatmul.bf16.gmra.mxu0 %v207
      %v225 = vpop.f32.mrf.mxu0
      %v226 = vadd.f32 0.0, %v225
      %v227 = vpop.f32.mrf.mxu0
      %228 = vdwg.mxu0
      %229 = vmatpush.bf16.msra.mxu0 0
      %230 = vmatpush.bf16.msra.mxu0 0
      %231 = vmatpush.bf16.msra.mxu0 0
      %232 = vmatpush.bf16.msra.mxu0 0
      %233 = vmatpush.bf16.msra.mxu0 0
      %234 = vmatpush.bf16.msra.mxu0 0
      %235 = vmatpush.bf16.msra.mxu0 0
      %236 = vmatpush.bf16.msra.mxu0 %v214
      %237 = vmatmul.bf16.gmra.mxu0 %v207
      %v238 = vpop.f32.mrf.mxu0
      %v239 = vadd.f32 0.0, %v238
      %v240 = vpop.f32.mrf.mxu0
      %241 = vdwg.mxu0
      %v244 = vrot.slane %v239, 4
      %vm245 = vcmask 1043456
      %v246 = vsel %vm245, %v226, %v244
      %248 = vst [vmem:[%s190] sm:$0xff] %v246
      %p249 = scmp.lt.s32.totalorder %s14, 1
      %s250 = scalar_select %p249, %s14, 1
      %s251 = smul.addr %s250, 2
      %s252 = smul.addr %s251, 4
      %s253 = scalar_lea.vmem %s3, %s252
      // Predicated region
      $region33: #{dhsa_forward.5} parent=31 // pred_check
        %p254 = pneg %p105
      $region34: #{dhsa_forward.5} parent=31 // pred_check_branch
        %256 = sbr.rel (%p254) target = $region36
      $region35: #{dhsa_forward.5} parent=31 // pred_region
        _
      $region36: #{dhsa_forward.5} parent=31 // pred_fallthru
        _
    $region32: #{dhsa_forward.5} parent=5 // pred_fallthru
      _
    %p257 = scmp.le.s32.totalorder 2, %s9
    // Predicated region
    $region37: #{dhsa_forward.5} parent=5 // pred_check
      %p258 = pneg %p257
    $region38: #{dhsa_forward.5} parent=5 // pred_check_branch
      %260 = sbr.rel (%p258) target = $region40
    $region39: #{dhsa_forward.5} parent=5 // pred_region
      %s261 = ssub.s32 %s9, 2
      // Predicated region
      $region41: #{dhsa_forward.5} parent=39 // pred_check
        %p262 = pneg %p111
      $region42: #{dhsa_forward.5} parent=39 // pred_check_branch
        %264 = sbr.rel (%p262) target = $region44
      $region43: #{dhsa_forward.5} parent=39 // pred_region
        %p265 = scmp.lt.s32.totalorder %s15, 1
        %s266 = scalar_select %p265, %s15, 1
        %s267 = smul.addr %s266, 2
        %s268 = smul.addr %s267, 4
        %s269 = scalar_lea.vmem %s3, %s268
      $region44: #{dhsa_forward.5} parent=39 // pred_fallthru
        _
    $region40: #{dhsa_forward.5} parent=5 // pred_fallthru
      _
  $region6: #{dhsa_forward.5} parent=0 // loop_footer
    %s13 = sadd.s32 1, %s9
  $region7: #{dhsa_forward.5} parent=0 // loop_footer_branch
    %8 = sbr.rel target = $region3
  $region8: #{dhsa_forward.5} parent=0 // loop_exit
    _

</llo_original>
